<compile_context>
chip_gen: v6e
topology: v6e:2x2x1
jax: 0.10.0
libtpu: 0.0.40
codegen_flags: <defaults>
</compile_context>

<pallas_src>
import functools

import jax
import jax.numpy as jnp
import numpy as np
from jax.experimental import pallas as pl
from jax.experimental.pallas import tpu as pltpu


# ---------------------------------------------------------------------------
# Fused kernel: one batch element x one Ho-tile per grid step
# ---------------------------------------------------------------------------
def _sepconv_kernel(x_ref, wd_ref, wp_ref, o_ref, dw_ref, *,
                    ks, stride, dilation, TH, Wo, n_chunks):
    """x_ref : (Hp, Wp, Cin)        full (padded) NHWC input plane (resident)
       wd_ref: (ks*ks, Cin)         depthwise taps, channels on lanes
       wp_ref: (Cin, Cout)          pointwise weight
       o_ref : (TH, Wo, Cout)       output tile
       dw_ref: (TH, Wo, Cin)        depthwise scratch in the matmul dtype
    """
    Cin = x_ref.shape[-1]
    Cout = o_ref.shape[-1]
    hb = pl.program_id(1)
    mm_dtype = dw_ref.dtype

    # Tiny weights: load once, hoist tap views out of all loops.
    wd = wd_ref[...].astype(jnp.float32)                      # (ks*ks, Cin)
    wp = wp_ref[...].astype(mm_dtype)                         # (Cin, Cout)
    taps = [wd[t, :].reshape(1, 1, Cin) for t in range(ks * ks)]

    CH = TH // n_chunks
    win_h = (CH - 1) * stride + 1
    win_w = (Wo - 1) * stride + 1
    rows_in = (CH - 1) * stride + (ks - 1) * dilation + 1

    for c in range(n_chunks):                                 # n_chunks <= 2 (static)
        hc0 = (hb * TH + c * CH) * stride                     # first input row of chunk

        # ---- depthwise: ks*ks shifted whole-chunk multiply-adds (f32) ----
        acc = None
        if stride == 1:
            for ki in range(ks):
                for kj in range(ks):
                    win = x_ref[pl.ds(hc0 + ki * dilation, CH),
                                pl.ds(kj * dilation, Wo), :].astype(jnp.float32)
                    term = win * taps[ki * ks + kj]
                    acc = term if acc is None else acc + term
        else:
            # TODO(synk): for stride>1, de-interleave the chunk once (even/odd
            # split) so tap slices are unit-stride instead of strided slices.
            xt = x_ref[pl.ds(hc0, rows_in), :, :].astype(jnp.float32)
            for ki in range(ks):
                for kj in range(ks):
                    h0 = ki * dilation
                    w0 = kj * dilation
                    win = xt[h0:h0 + win_h:stride, w0:w0 + win_w:stride, :]
                    term = win * taps[ki * ks + kj]
                    acc = term if acc is None else acc + term

        # One dense store of the chunk's depthwise result, already in matmul dtype.
        dw_ref[c * CH:(c + 1) * CH, :, :] = acc.astype(mm_dtype)

        # ---- pointwise: one lane-dense MXU matmul per chunk ----
        dwc = dw_ref[c * CH:(c + 1) * CH, :, :].reshape(CH * Wo, Cin)
        out = jnp.dot(dwc, wp, preferred_element_type=jnp.float32)
        o_ref[c * CH:(c + 1) * CH, :, :] = out.reshape(CH, Wo, Cout).astype(o_ref.dtype)


# ---------------------------------------------------------------------------
# Wrapper: layout, tiling decisions, pallas_call setup
# ---------------------------------------------------------------------------
def _largest_divisor_leq(n, cap):
    cap = max(1, min(n, cap))
    for d in range(cap, 0, -1):
        if n % d == 0:
            return d
    return 1


def separable_conv2d(x, w_depth, w_point, *, stride=1, padding=0, dilation=1):
    """x: (N, C_in, H, W); w_depth: (C_in, 1, ks, ks); w_point: (C_out, C_in, 1, 1)."""
    N, Cin, H, W = x.shape
    Cout = w_point.shape[0]
    ks = w_depth.shape[-1]

    # NCHW -> NHWC so channels land on the lane axis inside the kernel.
    # TODO(synk): in a multi-layer network keep activations NHWC end-to-end and
    # drop these boundary transposes (each is a full HBM read+write).
    x_nhwc = jnp.transpose(x, (0, 2, 3, 1))
    if padding:
        # TODO(synk): handle the halo in-kernel (offset + edge-tap masking)
        # instead of materializing a padded HBM copy.
        x_nhwc = jnp.pad(
            x_nhwc, ((0, 0), (padding, padding), (padding, padding), (0, 0)))
    Hp, Wp = x_nhwc.shape[1], x_nhwc.shape[2]
    Ho = (Hp - dilation * (ks - 1) - 1) // stride + 1
    Wo = (Wp - dilation * (ks - 1) - 1) // stride + 1
    assert Ho > 0 and Wo > 0

    wd = jnp.transpose(w_depth.reshape(Cin, ks * ks), (1, 0))   # (ks*ks, Cin)
    wp = jnp.transpose(w_point.reshape(Cout, Cin), (1, 0))      # (Cin, Cout)

    # Matmul operand dtype follows the INPUT dtype (f32 inputs -> f32 matmul).
    is_bf16 = jnp.dtype(x.dtype) == jnp.dtype(jnp.bfloat16)
    mm_dtype = jnp.bfloat16 if is_bf16 else jnp.float32
    mm_bytes = 2 if is_bf16 else 4

    # Spatial tiling over Ho: keep the per-tile f32 accumulator <= ~512 KiB.
    row_budget = max(1, (512 * 1024) // max(1, Wo * Cin * 4))
    TH = _largest_divisor_leq(Ho, row_budget)
    # Give v7x's two TensorCores >= 2 parallel programs even for batch 1.
    if N * (Ho // TH) < 2 and TH % 2 == 0:
        TH //= 2
    n_hb = Ho // TH

    # Intra-tile chunking so chunk i+1 depthwise (VPU) overlaps chunk i matmul (MXU).
    n_chunks = 2 if (TH % 2 == 0 and (TH // 2) * Wo >= 256) else 1

    itemsize = jnp.dtype(x.dtype).itemsize
    est_vmem = (2 * Hp * Wp * Cin * itemsize           # double-buffered input plane
                + 2 * TH * Wo * Cout * itemsize        # double-buffered output tile
                + TH * Wo * Cin * mm_bytes             # depthwise scratch
                + (ks * ks * Cin + Cin * Cout) * 4 * 2)
    vmem_limit = int(min(100 * 1024 * 1024,
                         max(32 * 1024 * 1024, est_vmem * 3 // 2)))

    kern = functools.partial(_sepconv_kernel, ks=ks, stride=stride,
                             dilation=dilation, TH=TH, Wo=Wo, n_chunks=n_chunks)

    out_nhwc = pl.pallas_call(
        kern,
        out_shape=jax.ShapeDtypeStruct((N, Ho, Wo, Cout), x.dtype),
        grid=(N, n_hb),
        in_specs=[
            # Full input plane per batch element; same block across the Ho-tile
            # axis, so it stays resident and tiles read their halo via pl.ds.
            pl.BlockSpec((None, Hp, Wp, Cin), lambda n, h: (n, 0, 0, 0)),
            pl.BlockSpec((ks * ks, Cin), lambda n, h: (0, 0)),
            pl.BlockSpec((Cin, Cout), lambda n, h: (0, 0)),
        ],
        out_specs=pl.BlockSpec((None, TH, Wo, Cout), lambda n, h: (n, h, 0, 0)),
        scratch_shapes=[pltpu.VMEM((TH, Wo, Cin), mm_dtype)],
        compiler_params=pltpu.CompilerParams(
            dimension_semantics=("parallel", "parallel"),
            vmem_limit_bytes=vmem_limit),
    )(x_nhwc, wd, wp)

    # NHWC -> NCHW (PyTorch layout)
    return jnp.transpose(out_nhwc, (0, 3, 1, 2))


# ---------------------------------------------------------------------------
# Pure-JAX reference (sanity check against XLA's conv)
# ---------------------------------------------------------------------------
def separable_conv2d_ref(x, w_depth, w_point, *, stride=1, padding=0, dilation=1):
    Cin = x.shape[1]
    dn = ("NCHW", "OIHW", "NCHW")
    y = jax.lax.conv_general_dilated(
        x, w_depth, (stride, stride), [(padding, padding)] * 2,
        rhs_dilation=(dilation, dilation), feature_group_count=Cin,
        dimension_numbers=dn)
    return jax.lax.conv_general_dilated(
        y, w_point, (1, 1), [(0, 0)] * 2, dimension_numbers=dn)


if __name__ == "__main__":
    # Module defaults: ks=3, stride=1, padding=0, dilation=1, bias=False.
    N, C_IN, C_OUT, H, W, KS = 2, 4, 8, 16, 16, 3

    key = jax.random.PRNGKey(0)
    kx, kd, kp = jax.random.split(key, 3)
    x = jax.random.normal(kx, (N, C_IN, H, W), jnp.float32)
    w_depth = 0.1 * jax.random.normal(kd, (C_IN, 1, KS, KS), jnp.float32)
    w_point = 0.1 * jax.random.normal(kp, (C_OUT, C_IN, 1, 1), jnp.float32)

    out = separable_conv2d(x, w_depth, w_point, stride=1, padding=0, dilation=1)
    out = jax.block_until_ready(out)

    ref = separable_conv2d_ref(x, w_depth, w_point, stride=1, padding=0, dilation=1)
    ref = jax.block_until_ready(ref)

    assert out.shape == (N, C_OUT, H - KS + 1, W - KS + 1), out.shape
    np.testing.assert_allclose(np.asarray(out), np.asarray(ref), atol=1e-4, rtol=1e-4)

    print("KERNEL_OK")
</pallas_src>

<mosaic_0001>
module attributes {stable_mosaic.version = 11 : i64} {
  func.func @_sepconv_kernel(%arg0: i32, %arg1: i32, %arg2: memref<1x16x16x4xf32, #tpu.memory_space<vmem>>, %arg3: memref<9x4xf32, #tpu.memory_space<vmem>>, %arg4: memref<4x8xf32, #tpu.memory_space<vmem>>, %arg5: memref<1x14x14x8xf32, #tpu.memory_space<vmem>>, %arg6: memref<14x14x4xf32, #tpu.memory_space<vmem>>) attributes {dimension_semantics = [#tpu.dimension_semantics<parallel>, #tpu.dimension_semantics<parallel>], iteration_bounds = array<i64: 2, 1>, scalar_prefetch = 0 : i64, scratch_operands = 1 : i64, tpu.core_type = #tpu.core_type<tc>, window_params = [{transform_indices = @transform_0, window_bounds = array<i64: 1, 16, 16, 4>}, {pipeline_mode = #tpu.pipeline_mode<synchronous>, transform_indices = @transform_1, window_bounds = array<i64: 9, 4>}, {pipeline_mode = #tpu.pipeline_mode<synchronous>, transform_indices = @transform_2, window_bounds = array<i64: 4, 8>}, {transform_indices = @transform_3, window_bounds = array<i64: 1, 14, 14, 8>}]} {
    %c0 = arith.constant 0 : index
    %c0_0 = arith.constant 0 : index
    %0 = vector.load %arg3[%c0, %c0_0] : memref<9x4xf32, #tpu.memory_space<vmem>>, vector<9x4xf32>
    %c0_1 = arith.constant 0 : index
    %c0_2 = arith.constant 0 : index
    %1 = vector.load %arg4[%c0_1, %c0_2] : memref<4x8xf32, #tpu.memory_space<vmem>>, vector<4x8xf32>
    %2 = vector.extract_strided_slice %0 {offsets = [0, 0], sizes = [1, 4], strides = [1, 1]} : vector<9x4xf32> to vector<1x4xf32>
    %3 = vector.shape_cast %2 : vector<1x4xf32> to vector<4xf32>
    %4 = vector.shape_cast %3 : vector<4xf32> to vector<1x1x4xf32>
    %5 = vector.extract_strided_slice %0 {offsets = [1, 0], sizes = [1, 4], strides = [1, 1]} : vector<9x4xf32> to vector<1x4xf32>
    %6 = vector.shape_cast %5 : vector<1x4xf32> to vector<4xf32>
    %7 = vector.shape_cast %6 : vector<4xf32> to vector<1x1x4xf32>
    %8 = vector.extract_strided_slice %0 {offsets = [2, 0], sizes = [1, 4], strides = [1, 1]} : vector<9x4xf32> to vector<1x4xf32>
    %9 = vector.shape_cast %8 : vector<1x4xf32> to vector<4xf32>
    %10 = vector.shape_cast %9 : vector<4xf32> to vector<1x1x4xf32>
    %11 = vector.extract_strided_slice %0 {offsets = [3, 0], sizes = [1, 4], strides = [1, 1]} : vector<9x4xf32> to vector<1x4xf32>
    %12 = vector.shape_cast %11 : vector<1x4xf32> to vector<4xf32>
    %13 = vector.shape_cast %12 : vector<4xf32> to vector<1x1x4xf32>
    %14 = vector.extract_strided_slice %0 {offsets = [4, 0], sizes = [1, 4], strides = [1, 1]} : vector<9x4xf32> to vector<1x4xf32>
    %15 = vector.shape_cast %14 : vector<1x4xf32> to vector<4xf32>
    %16 = vector.shape_cast %15 : vector<4xf32> to vector<1x1x4xf32>
    %17 = vector.extract_strided_slice %0 {offsets = [5, 0], sizes = [1, 4], strides = [1, 1]} : vector<9x4xf32> to vector<1x4xf32>
    %18 = vector.shape_cast %17 : vector<1x4xf32> to vector<4xf32>
    %19 = vector.shape_cast %18 : vector<4xf32> to vector<1x1x4xf32>
    %20 = vector.extract_strided_slice %0 {offsets = [6, 0], sizes = [1, 4], strides = [1, 1]} : vector<9x4xf32> to vector<1x4xf32>
    %21 = vector.shape_cast %20 : vector<1x4xf32> to vector<4xf32>
    %22 = vector.shape_cast %21 : vector<4xf32> to vector<1x1x4xf32>
    %23 = vector.extract_strided_slice %0 {offsets = [7, 0], sizes = [1, 4], strides = [1, 1]} : vector<9x4xf32> to vector<1x4xf32>
    %24 = vector.shape_cast %23 : vector<1x4xf32> to vector<4xf32>
    %25 = vector.shape_cast %24 : vector<4xf32> to vector<1x1x4xf32>
    %26 = vector.extract_strided_slice %0 {offsets = [8, 0], sizes = [1, 4], strides = [1, 1]} : vector<9x4xf32> to vector<1x4xf32>
    %27 = vector.shape_cast %26 : vector<1x4xf32> to vector<4xf32>
    %28 = vector.shape_cast %27 : vector<4xf32> to vector<1x1x4xf32>
    %c14_i32 = arith.constant 14 : i32
    %29 = arith.muli %arg1, %c14_i32 : i32
    %c0_i32 = arith.constant 0 : i32
    %30 = arith.addi %29, %c0_i32 : i32
    %c1_i32 = arith.constant 1 : i32
    %31 = arith.muli %30, %c1_i32 : i32
    %c0_i32_3 = arith.constant 0 : i32
    %32 = arith.addi %31, %c0_i32_3 : i32
    %c0_4 = arith.constant 0 : index
    %33 = arith.index_cast %32 : i32 to index
    %c0_5 = arith.constant 0 : index
    %c0_6 = arith.constant 0 : index
    %34 = vector.load %arg2[%c0_4, %33, %c0_5, %c0_6] : memref<1x16x16x4xf32, #tpu.memory_space<vmem>>, vector<1x14x14x4xf32>
    %35 = vector.shape_cast %34 : vector<1x14x14x4xf32> to vector<14x14x4xf32>
    %36 = vector.broadcast %4 : vector<1x1x4xf32> to vector<14x14x4xf32>
    %37 = arith.mulf %35, %36 : vector<14x14x4xf32>
    %c0_i32_7 = arith.constant 0 : i32
    %38 = arith.addi %31, %c0_i32_7 : i32
    %c0_8 = arith.constant 0 : index
    %39 = arith.index_cast %38 : i32 to index
    %c1 = arith.constant 1 : index
    %c0_9 = arith.constant 0 : index
    %40 = vector.load %arg2[%c0_8, %39, %c1, %c0_9] : memref<1x16x16x4xf32, #tpu.memory_space<vmem>>, vector<1x14x14x4xf32>
    %41 = vector.shape_cast %40 : vector<1x14x14x4xf32> to vector<14x14x4xf32>
    %42 = vector.broadcast %7 : vector<1x1x4xf32> to vector<14x14x4xf32>
    %43 = arith.mulf %41, %42 : vector<14x14x4xf32>
    %44 = arith.addf %37, %43 : vector<14x14x4xf32>
    %c0_i32_10 = arith.constant 0 : i32
    %45 = arith.addi %31, %c0_i32_10 : i32
    %c0_11 = arith.constant 0 : index
    %46 = arith.index_cast %45 : i32 to index
    %c2 = arith.constant 2 : index
    %c0_12 = arith.constant 0 : index
    %47 = vector.load %arg2[%c0_11, %46, %c2, %c0_12] : memref<1x16x16x4xf32, #tpu.memory_space<vmem>>, vector<1x14x14x4xf32>
    %48 = vector.shape_cast %47 : vector<1x14x14x4xf32> to vector<14x14x4xf32>
    %49 = vector.broadcast %10 : vector<1x1x4xf32> to vector<14x14x4xf32>
    %50 = arith.mulf %48, %49 : vector<14x14x4xf32>
    %51 = arith.addf %44, %50 : vector<14x14x4xf32>
    %c1_i32_13 = arith.constant 1 : i32
    %52 = arith.addi %31, %c1_i32_13 : i32
    %c0_14 = arith.constant 0 : index
    %53 = arith.index_cast %52 : i32 to index
    %c0_15 = arith.constant 0 : index
    %c0_16 = arith.constant 0 : index
    %54 = vector.load %arg2[%c0_14, %53, %c0_15, %c0_16] : memref<1x16x16x4xf32, #tpu.memory_space<vmem>>, vector<1x14x14x4xf32>
    %55 = vector.shape_cast %54 : vector<1x14x14x4xf32> to vector<14x14x4xf32>
    %56 = vector.broadcast %13 : vector<1x1x4xf32> to vector<14x14x4xf32>
    %57 = arith.mulf %55, %56 : vector<14x14x4xf32>
    %58 = arith.addf %51, %57 : vector<14x14x4xf32>
    %c1_i32_17 = arith.constant 1 : i32
    %59 = arith.addi %31, %c1_i32_17 : i32
    %c0_18 = arith.constant 0 : index
    %60 = arith.index_cast %59 : i32 to index
    %c1_19 = arith.constant 1 : index
    %c0_20 = arith.constant 0 : index
    %61 = vector.load %arg2[%c0_18, %60, %c1_19, %c0_20] : memref<1x16x16x4xf32, #tpu.memory_space<vmem>>, vector<1x14x14x4xf32>
    %62 = vector.shape_cast %61 : vector<1x14x14x4xf32> to vector<14x14x4xf32>
    %63 = vector.broadcast %16 : vector<1x1x4xf32> to vector<14x14x4xf32>
    %64 = arith.mulf %62, %63 : vector<14x14x4xf32>
    %65 = arith.addf %58, %64 : vector<14x14x4xf32>
    %c1_i32_21 = arith.constant 1 : i32
    %66 = arith.addi %31, %c1_i32_21 : i32
    %c0_22 = arith.constant 0 : index
    %67 = arith.index_cast %66 : i32 to index
    %c2_23 = arith.constant 2 : index
    %c0_24 = arith.constant 0 : index
    %68 = vector.load %arg2[%c0_22, %67, %c2_23, %c0_24] : memref<1x16x16x4xf32, #tpu.memory_space<vmem>>, vector<1x14x14x4xf32>
    %69 = vector.shape_cast %68 : vector<1x14x14x4xf32> to vector<14x14x4xf32>
    %70 = vector.broadcast %19 : vector<1x1x4xf32> to vector<14x14x4xf32>
    %71 = arith.mulf %69, %70 : vector<14x14x4xf32>
    %72 = arith.addf %65, %71 : vector<14x14x4xf32>
    %c2_i32 = arith.constant 2 : i32
    %73 = arith.addi %31, %c2_i32 : i32
    %c0_25 = arith.constant 0 : index
    %74 = arith.index_cast %73 : i32 to index
    %c0_26 = arith.constant 0 : index
    %c0_27 = arith.constant 0 : index
    %75 = vector.load %arg2[%c0_25, %74, %c0_26, %c0_27] : memref<1x16x16x4xf32, #tpu.memory_space<vmem>>, vector<1x14x14x4xf32>
    %76 = vector.shape_cast %75 : vector<1x14x14x4xf32> to vector<14x14x4xf32>
    %77 = vector.broadcast %22 : vector<1x1x4xf32> to vector<14x14x4xf32>
    %78 = arith.mulf %76, %77 : vector<14x14x4xf32>
    %79 = arith.addf %72, %78 : vector<14x14x4xf32>
    %c2_i32_28 = arith.constant 2 : i32
    %80 = arith.addi %31, %c2_i32_28 : i32
    %c0_29 = arith.constant 0 : index
    %81 = arith.index_cast %80 : i32 to index
    %c1_30 = arith.constant 1 : index
    %c0_31 = arith.constant 0 : index
    %82 = vector.load %arg2[%c0_29, %81, %c1_30, %c0_31] : memref<1x16x16x4xf32, #tpu.memory_space<vmem>>, vector<1x14x14x4xf32>
    %83 = vector.shape_cast %82 : vector<1x14x14x4xf32> to vector<14x14x4xf32>
    %84 = vector.broadcast %25 : vector<1x1x4xf32> to vector<14x14x4xf32>
    %85 = arith.mulf %83, %84 : vector<14x14x4xf32>
    %86 = arith.addf %79, %85 : vector<14x14x4xf32>
    %c2_i32_32 = arith.constant 2 : i32
    %87 = arith.addi %31, %c2_i32_32 : i32
    %c0_33 = arith.constant 0 : index
    %88 = arith.index_cast %87 : i32 to index
    %c2_34 = arith.constant 2 : index
    %c0_35 = arith.constant 0 : index
    %89 = vector.load %arg2[%c0_33, %88, %c2_34, %c0_35] : memref<1x16x16x4xf32, #tpu.memory_space<vmem>>, vector<1x14x14x4xf32>
    %90 = vector.shape_cast %89 : vector<1x14x14x4xf32> to vector<14x14x4xf32>
    %91 = vector.broadcast %28 : vector<1x1x4xf32> to vector<14x14x4xf32>
    %92 = arith.mulf %90, %91 : vector<14x14x4xf32>
    %93 = arith.addf %86, %92 : vector<14x14x4xf32>
    %c0_36 = arith.constant 0 : index
    %c0_37 = arith.constant 0 : index
    %c0_38 = arith.constant 0 : index
    %94 = vector.load %arg6[%c0_36, %c0_37, %c0_38] : memref<14x14x4xf32, #tpu.memory_space<vmem>>, vector<14x14x4xf32>
    tpu.vector_store %arg6[%c0_36, %c0_37, %c0_38], %93 {strides = array<i32>} : memref<14x14x4xf32, #tpu.memory_space<vmem>>, vector<14x14x4xf32>,
    %c0_39 = arith.constant 0 : index
    %c0_40 = arith.constant 0 : index
    %c0_41 = arith.constant 0 : index
    %95 = vector.load %arg6[%c0_39, %c0_40, %c0_41] : memref<14x14x4xf32, #tpu.memory_space<vmem>>, vector<14x14x4xf32>
    %96 = vector.shape_cast %95 : vector<14x14x4xf32> to vector<196x4xf32>
    %cst = arith.constant dense<0.000000e+00> : vector<196x8xf32>
    %97 = tpu.matmul %96, %1, %cst {dimension_numbers = #tpu.dot_dimension_numbers<[1], [0], [0], [1], [0, 0, 1, 1], [], []>} : vector<196x4xf32>, vector<4x8xf32>, vector<196x8xf32> -> vector<196x8xf32>
    %98 = vector.shape_cast %97 : vector<196x8xf32> to vector<14x14x8xf32>
    %c0_42 = arith.constant 0 : index
    %c0_43 = arith.constant 0 : index
    %c0_44 = arith.constant 0 : index
    %c0_45 = arith.constant 0 : index
    %99 = vector.load %arg5[%c0_42, %c0_43, %c0_44, %c0_45] : memref<1x14x14x8xf32, #tpu.memory_space<vmem>>, vector<1x14x14x8xf32>
    %100 = vector.shape_cast %99 : vector<1x14x14x8xf32> to vector<14x14x8xf32>
    %101 = vector.shape_cast %98 : vector<14x14x8xf32> to vector<1x14x14x8xf32>
    tpu.vector_store %arg5[%c0_42, %c0_43, %c0_44, %c0_45], %101 {strides = array<i32>} : memref<1x14x14x8xf32, #tpu.memory_space<vmem>>, vector<1x14x14x8xf32>,
    return
  }
  func.func @transform_0(%arg0: i32, %arg1: i32) -> (i32, i32, i32, i32) {
    %c0_i32 = arith.constant 0 : i32
    %c0_i32_0 = arith.constant 0 : i32
    %c0_i32_1 = arith.constant 0 : i32
    %c0_i32_2 = arith.constant 0 : i32
    return %arg0, %c0_i32, %c0_i32_0, %c0_i32_1 : i32, i32, i32, i32
  }
  func.func @transform_1(%arg0: i32, %arg1: i32) -> (i32, i32) {
    %c0_i32 = arith.constant 0 : i32
    %c0_i32_0 = arith.constant 0 : i32
    %c0_i32_1 = arith.constant 0 : i32
    return %c0_i32, %c0_i32_0 : i32, i32
  }
  func.func @transform_2(%arg0: i32, %arg1: i32) -> (i32, i32) {
    %c0_i32 = arith.constant 0 : i32
    %c0_i32_0 = arith.constant 0 : i32
    %c0_i32_1 = arith.constant 0 : i32
    return %c0_i32, %c0_i32_0 : i32, i32
  }
  func.func @transform_3(%arg0: i32, %arg1: i32) -> (i32, i32, i32, i32) {
    %c0_i32 = arith.constant 0 : i32
    %c0_i32_0 = arith.constant 0 : i32
    %c0_i32_1 = arith.constant 0 : i32
    return %arg0, %arg1, %c0_i32, %c0_i32_0 : i32, i32, i32, i32
  }
}

</mosaic_0001>

<llo_original>
// kernel: tpu_custom_call.1
$region0: #{tpu_custom_call.1}
  #allocation0 [shape = 'u32[]', space=smem, size = 0x4, offset = 0x4, fixed_abs, tag = 'smem constant byte address 0x4 - core index']
  #allocation1 [shape = 'u32[144,128]{1,0:T(1,128)}', space=vmem, size = 0x12000, scoped, tag = 'internal scratch']
  #allocation2 [shape = 'f32[14,14,4]{2,1,0:T(8,128)}', space=vmem, size = 0x1c000, scoped, tag = 'scratch operand']
  %s0 = inlined_call_operand.vmem [shape: f32[2,16,16,4], index: 0, kind: input, shape index: {}]
  %s1 = inlined_call_operand.vmem [shape: f32[9,4], index: 1, kind: input, shape index: {}]
  %s2 = inlined_call_operand.vmem [shape: f32[4,8], index: 2, kind: input, shape index: {}]
  %s3 = inlined_call_operand.vmem [shape: f32[2,14,14,8], index: 3, kind: output, shape index: {}]
  %s4 = sld [smem:[#allocation0]]
  $region45: #{tpu_custom_call.1} parent=0
    _
  %s6 = ssub.s32 1, %s4
  %s7 = scalar_select 0, %s6, %s4
  loop: start=0, step=1, limit=4
  $region2: #{tpu_custom_call.1} parent=0 // loop_pre_header
    _
  $region3: #{tpu_custom_call.1} parent=0 // loop_header
    %s9 = sphi 0, %s13
    %p10 = scmp.ge.s32.totalorder %s9, 4
    %s16 = sphi 0, %s28
    %s17 = sphi 0, %s24
    %s18 = sphi 0, %s16
    %s19 = sphi 0, %s17
    %s20 = sphi 0, %s18
    %s21 = sphi 0, %s19
    %s31 = sphi 0, %s33
    %s34 = sphi 0, %s31
    %s35 = sphi 0, %s34
    %s51 = sphi 0, %s35
    %s55 = sphi 0, %s55
    %s57 = sphi 0, %s55
    %s58 = sphi 0, %s57
    %s72 = sphi 0, %s58
    %s76 = sphi 0, %s76
    %s78 = sphi 0, %s76
    %s79 = sphi 0, %s78
    %s93 = sphi 0, %s79
    %s101 = sphi 0, %s103
    %s104 = sphi 0, %s101
    %s105 = sphi 0, %s104
    %s121 = sphi 0, %s105
  $region4: #{tpu_custom_call.1} parent=0 // loop_header_branch
    %12 = sbr.rel (%p10) target = $region8
  $region5: #{tpu_custom_call.1} parent=0 // loop_body
    %s14 = ssub.s32 %s9, 1
    %s15 = ssub.s32 %s9, 2
    %s22 = sadd.s32 1, %s17
    %p23 = scmp.ge.s32.totalorder %s22, 1
    %s24 = scalar_select %p23, 0, %s22
    %s25 = sadd.s32 1, %s16
    %s26 = scalar_select %p23, %s25, %s16
    %p27 = scmp.ge.s32.totalorder %s26, 2
    %s28 = scalar_select %p27, 0, %s26
    %s29 = ssub.s32 %s16, %s28
    %p30 = scmp.eq.s32.totalorder %s29, 0
    %s32 = sadd.s32 %s31, 1
    %s33 = scalar_select %p30, %s31, %s32
    %p36 = pneg %p30
    %p37 = scmp.eq.s32.totalorder %s9, 1
    %p38 = por %p36, %p37
    %p39 = scmp.ne.s32.totalorder %s31, %s34
    %p40 = scmp.eq.s32.totalorder %s9, 0
    %p41 = por %p39, %p40
    %p42 = scmp.ne.s32.totalorder %s31, %s34
    %p43 = scmp.eq.s32.totalorder %s14, 1
    %p44 = por %p42, %p43
    %p45 = scmp.ne.s32.totalorder %s34, %s35
    %p46 = scmp.eq.s32.totalorder %s14, 0
    %p47 = por %p45, %p46
    %p48 = scmp.ne.s32.totalorder %s34, %s35
    %p49 = scmp.eq.s32.totalorder %s15, 1
    %p50 = por %p48, %p49
    %p52 = scmp.ne.s32.totalorder %s35, %s51
    %p53 = scmp.eq.s32.totalorder %s15, 0
    %p54 = por %p52, %p53
    %s56 = sadd.s32 %s55, 1
    %p59 = scmp.eq.s32.totalorder %s9, 1
    %p60 = scmp.ne.s32.totalorder %s55, %s57
    %p61 = scmp.eq.s32.totalorder %s9, 0
    %p62 = por %p60, %p61
    %p63 = scmp.ne.s32.totalorder %s55, %s57
    %p64 = scmp.eq.s32.totalorder %s14, 1
    %p65 = por %p63, %p64
    %p66 = scmp.ne.s32.totalorder %s57, %s58
    %p67 = scmp.eq.s32.totalorder %s14, 0
    %p68 = por %p66, %p67
    %p69 = scmp.ne.s32.totalorder %s57, %s58
    %p70 = scmp.eq.s32.totalorder %s15, 1
    %p71 = por %p69, %p70
    %p73 = scmp.ne.s32.totalorder %s58, %s72
    %p74 = scmp.eq.s32.totalorder %s15, 0
    %p75 = por %p73, %p74
    %s77 = sadd.s32 %s76, 1
    %p80 = scmp.eq.s32.totalorder %s9, 1
    %p81 = scmp.ne.s32.totalorder %s76, %s78
    %p82 = scmp.eq.s32.totalorder %s9, 0
    %p83 = por %p81, %p82
    %p84 = scmp.ne.s32.totalorder %s76, %s78
    %p85 = scmp.eq.s32.totalorder %s14, 1
    %p86 = por %p84, %p85
    %p87 = scmp.ne.s32.totalorder %s78, %s79
    %p88 = scmp.eq.s32.totalorder %s14, 0
    %p89 = por %p87, %p88
    %p90 = scmp.ne.s32.totalorder %s78, %s79
    %p91 = scmp.eq.s32.totalorder %s15, 1
    %p92 = por %p90, %p91
    %p94 = scmp.ne.s32.totalorder %s79, %s93
    %p95 = scmp.eq.s32.totalorder %s15, 0
    %p96 = por %p94, %p95
    %s97 = ssub.s32 %s16, %s28
    %s98 = ssub.s32 %s17, %s24
    %s99 = sor.u32 %s97, %s98
    %p100 = scmp.eq.s32.totalorder %s99, 0
    %s102 = sadd.s32 %s101, 1
    %s103 = scalar_select %p100, %s101, %s102
    %p106 = pneg %p100
    %p107 = scmp.eq.s32.totalorder %s9, 1
    %p108 = por %p106, %p107
    %p109 = scmp.ne.s32.totalorder %s101, %s104
    %p110 = scmp.eq.s32.totalorder %s9, 0
    %p111 = por %p109, %p110
    %p112 = scmp.ne.s32.totalorder %s101, %s104
    %p113 = scmp.eq.s32.totalorder %s14, 1
    %p114 = por %p112, %p113
    %p115 = scmp.ne.s32.totalorder %s104, %s105
    %p116 = scmp.eq.s32.totalorder %s14, 0
    %p117 = por %p115, %p116
    %p118 = scmp.ne.s32.totalorder %s104, %s105
    %p119 = scmp.eq.s32.totalorder %s15, 1
    %p120 = por %p118, %p119
    %p122 = scmp.ne.s32.totalorder %s105, %s121
    %p123 = scmp.eq.s32.totalorder %s15, 0
    %p124 = por %p122, %p123
    %p125 = scmp.le.s32.totalorder 1, %s9
    %p126 = scmp.lt.s32.totalorder %s9, 3
    %p127 = pnand %p125, %p126
    %p128 = pneg %p127
    // Predicated region
    $region9: #{tpu_custom_call.1} parent=5 // pred_check
      _
    $region10: #{tpu_custom_call.1} parent=5 // pred_check_branch
      %130 = sbr.rel (%p127) target = $region12
    $region11: #{tpu_custom_call.1} parent=5 // pred_region
      %s131 = ssub.s32 %s9, 1
      // Predicated region
      $region13: #{tpu_custom_call.1} parent=11 // pred_check
        %p132 = pneg %p68
      $region14: #{tpu_custom_call.1} parent=11 // pred_check_branch
        %134 = sbr.rel (%p132) target = $region16
      $region15: #{tpu_custom_call.1} parent=11 // pred_region
        _
      $region16: #{tpu_custom_call.1} parent=11 // pred_fallthru
        _
      // Predicated region
      $region17: #{tpu_custom_call.1} parent=11 // pred_check
        %p135 = pneg %p89
      $region18: #{tpu_custom_call.1} parent=11 // pred_check_branch
        %137 = sbr.rel (%p135) target = $region20
      $region19: #{tpu_custom_call.1} parent=11 // pred_region
        _
      $region20: #{tpu_custom_call.1} parent=11 // pred_fallthru
        _
    $region12: #{tpu_custom_call.1} parent=5 // pred_fallthru
      _
    %p138 = scmp.lt.s32.totalorder %s9, 2
    // Predicated region
    $region21: #{tpu_custom_call.1} parent=5 // pred_check
      %p139 = pneg %p138
    $region22: #{tpu_custom_call.1} parent=5 // pred_check_branch
      %141 = sbr.rel (%p139) target = $region24
    $region23: #{tpu_custom_call.1} parent=5 // pred_region
      // Predicated region
      $region25: #{tpu_custom_call.1} parent=23 // pred_check
        %p142 = pneg %p41
      $region26: #{tpu_custom_call.1} parent=23 // pred_check_branch
        %144 = sbr.rel (%p142) target = $region28
      $region27: #{tpu_custom_call.1} parent=23 // pred_region
        %p145 = scmp.lt.s32.totalorder %s16, 1
        %s146 = scalar_select %p145, %s16, 1
        %s147 = smul.addr %s146, 32
        %s148 = smul.addr %s147, 8
        %s149 = scalar_lea.vmem %s0, %s148
      $region28: #{tpu_custom_call.1} parent=23 // pred_fallthru
        _
    $region24: #{tpu_custom_call.1} parent=5 // pred_fallthru
      _
    %p150 = scmp.le.s32.totalorder 1, %s9
    %p151 = scmp.lt.s32.totalorder %s9, 3
    %p152 = pnand %p150, %p151
    %p153 = pneg %p152
    // Predicated region
    $region29: #{tpu_custom_call.1} parent=5 // pred_check
      _
    $region30: #{tpu_custom_call.1} parent=5 // pred_check_branch
      %155 = sbr.rel (%p152) target = $region32
    $region31: #{tpu_custom_call.1} parent=5 // pred_region
      %s156 = ssub.s32 %s9, 1
      %p157 = scmp.lt.s32.totalorder %s18, 1
      %s158 = scalar_select %p157, %s18, 1
      %s159 = smul.addr %s158, 32
      %s160 = smul.addr %s159, 8
      %s161 = scalar_lea.vmem %s0, %s160
      %p162 = pneg %p47
      %p163 = pneg %p44
      %p164 = pneg %p68
      %p165 = pneg %p65
      %p166 = pneg %p89
      %p167 = pneg %p86
      %p168 = pneg %p117
      %p169 = pneg %p114
      %s170 = smul.u32 14, %s19
      %p171 = scmp.lt.s32.totalorder %s18, 1
      %s172 = scalar_select %p171, %s18, 1
      %p173 = scmp.lt.s32.totalorder %s170, 13
      %s174 = scalar_select %p173, %s170, 13
      %s175 = smul.addr %s174, 2
      %s176 = smul.addr %s172, 28
      %s177 = sadd.s32 %s175, %s176
      %s178 = smul.addr %s177, 8
      %s179 = scalar_lea.vmem %s3, %s178
      %p180 = scmp.lt.s32.totalorder %s18, 1
      %s181 = scalar_select %p180, %s18, 1
      %s182 = smul.addr %s181, 32
      %s183 = smul.addr %s182, 8
      %s184 = scalar_lea.vmem %s0, %s183
      %s185 = smul.u32 14, %s19
      %p186 = scmp.lt.s32.totalorder %s18, 1
      %s187 = scalar_select %p186, %s18, 1
      %p188 = scmp.lt.s32.totalorder %s185, 13
      %s189 = scalar_select %p188, %s185, 13
      %s190 = smul.addr %s189, 2
      %s191 = smul.addr %s187, 28
      %s192 = sadd.s32 %s190, %s191
      %s193 = smul.addr %s192, 8
      %s194 = scalar_lea.vmem %s3, %s193
      %s195 = smul.u32 14, %s19
      %v196 = vld [vmem:[%s1] sm:$0xff]
      %v197 = vld [vmem:[%s1 + $0x8] sm:$0x1]
      %v198 = vld [vmem:[%s2] sm:$0xf]
      %s199 = smul.u32 %s19, 14
      %s200 = smul.u32 %s199, 16
      %s201 = scalar_lea.vmem %s184, %s200
      %v202 = vld [vmem:[%s201] sm:$0xff]
      %v203 = vld [vmem:[%s201 + $0x8] sm:$0x3f]
      %v204 = vld [vmem:[%s201 + $0x10] sm:$0xff]
      %v205 = vld [vmem:[%s201 + $0x18] sm:$0x3f]
      %v206 = vld [vmem:[%s201 + $0x20] sm:$0xff]
      %v207 = vld [vmem:[%s201 + $0x28] sm:$0x3f]
      %v208 = vld [vmem:[%s201 + $0x30] sm:$0xff]
      %v209 = vld [vmem:[%s201 + $0x38] sm:$0x3f]
      %v210 = vld [vmem:[%s201 + $0x40] sm:$0xff]
      %v211 = vld [vmem:[%s201 + $0x48] sm:$0x3f]
      %v212 = vld [vmem:[%s201 + $0x50] sm:$0xff]
      %v213 = vld [vmem:[%s201 + $0x58] sm:$0x3f]
      %v214 = vld [vmem:[%s201 + $0x60] sm:$0xff]
      %v215 = vld [vmem:[%s201 + $0x68] sm:$0x3f]
      %v216 = vld [vmem:[%s201 + $0x70] sm:$0xff]
      %v217 = vld [vmem:[%s201 + $0x78] sm:$0x3f]
      %v218 = vld [vmem:[%s201 + $0x80] sm:$0xff]
      %v219 = vld [vmem:[%s201 + $0x88] sm:$0x3f]
      %v220 = vld [vmem:[%s201 + $0x90] sm:$0xff]
      %v221 = vld [vmem:[%s201 + $0x98] sm:$0x3f]
      %v222 = vld [vmem:[%s201 + $0xa0] sm:$0xff]
      %v223 = vld [vmem:[%s201 + $0xa8] sm:$0x3f]
      %v224 = vld [vmem:[%s201 + $0xb0] sm:$0xff]
      %v225 = vld [vmem:[%s201 + $0xb8] sm:$0x3f]
      %v226 = vld [vmem:[%s201 + $0xc0] sm:$0xff]
      %v227 = vld [vmem:[%s201 + $0xc8] sm:$0x3f]
      %v228 = vld [vmem:[%s201 + $0xd0] sm:$0xff]
      %v229 = vld [vmem:[%s201 + $0xd8] sm:$0x3f]
      %v230 = vlaneseq
      %v231 = vshrl.u32 %v230, 7
      %v232 = vsub.s32 0, %v231
      %v233 = vrot.slane %v196, %v232
      %v234 = vmul.f32 %v202, %v233
      %v235 = vmul.f32 %v203, %v233
      %v236 = vmul.f32 %v204, %v233
      %v237 = vmul.f32 %v205, %v233
      %v238 = vmul.f32 %v206, %v233
      %v239 = vmul.f32 %v207, %v233
      %v240 = vmul.f32 %v208, %v233
      %v241 = vmul.f32 %v209, %v233
      %v242 = vmul.f32 %v210, %v233
      %v243 = vmul.f32 %v211, %v233
      %v244 = vmul.f32 %v212, %v233
      %v245 = vmul.f32 %v213, %v233
      %v246 = vmul.f32 %v214, %v233
      %v247 = vmul.f32 %v215, %v233
      %v248 = vmul.f32 %v216, %v233
      %v249 = vmul.f32 %v217, %v233
      %v250 = vmul.f32 %v218, %v233
      %v251 = vmul.f32 %v219, %v233
      %v252 = vmul.f32 %v220, %v233
      %v253 = vmul.f32 %v221, %v233
      %v254 = vmul.f32 %v222, %v233
      %v255 = vmul.f32 %v223, %v233
      %v256 = vmul.f32 %v224, %v233
      %v257 = vmul.f32 %v225, %v233
      %v258 = vmul.f32 %v226, %v233
      %v259 = vmul.f32 %v227, %v233
      %v260 = vmul.f32 %v228, %v233
      %v261 = vmul.f32 %v229, %v233
      %v262 = vld [vmem:[%s201 + $0x1] sm:$0xff]
      %v263 = vld [vmem:[%s201 + $0x9] sm:$0x3f]
      %v264 = vld [vmem:[%s201 + $0x11] sm:$0xff]
      %v265 = vld [vmem:[%s201 + $0x19] sm:$0x3f]
      %v266 = vld [vmem:[%s201 + $0x21] sm:$0xff]
      %v267 = vld [vmem:[%s201 + $0x29] sm:$0x3f]
      %v268 = vld [vmem:[%s201 + $0x31] sm:$0xff]
      %v269 = vld [vmem:[%s201 + $0x39] sm:$0x3f]
      %v270 = vld [vmem:[%s201 + $0x41] sm:$0xff]
      %v271 = vld [vmem:[%s201 + $0x49] sm:$0x3f]
      %v272 = vld [vmem:[%s201 + $0x51] sm:$0xff]
      %v273 = vld [vmem:[%s201 + $0x59] sm:$0x3f]
      %v274 = vld [vmem:[%s201 + $0x61] sm:$0xff]
      %v275 = vld [vmem:[%s201 + $0x69] sm:$0x3f]
      %v276 = vld [vmem:[%s201 + $0x71] sm:$0xff]
      %v277 = vld [vmem:[%s201 + $0x79] sm:$0x3f]
      %v278 = vld [vmem:[%s201 + $0x81] sm:$0xff]
      %v279 = vld [vmem:[%s201 + $0x89] sm:$0x3f]
      %v280 = vld [vmem:[%s201 + $0x91] sm:$0xff]
      %v281 = vld [vmem:[%s201 + $0x99] sm:$0x3f]
      %v282 = vld [vmem:[%s201 + $0xa1] sm:$0xff]
      %v283 = vld [vmem:[%s201 + $0xa9] sm:$0x3f]
      %v284 = vld [vmem:[%s201 + $0xb1] sm:$0xff]
      %v285 = vld [vmem:[%s201 + $0xb9] sm:$0x3f]
      %v286 = vld [vmem:[%s201 + $0xc1] sm:$0xff]
      %v287 = vld [vmem:[%s201 + $0xc9] sm:$0x3f]
      %v288 = vld [vmem:[%s201 + $0xd1] sm:$0xff]
      %v289 = vld [vmem:[%s201 + $0xd9] sm:$0x3f]
      %v290 = vlaneseq
      %v291 = vshrl.u32 %v290, 7
      %v292 = vsub.s32 1, %v291
      %v293 = vrot.slane %v196, %v292
      %v294 = vmul.f32 %v262, %v293
      %v295 = vmul.f32 %v263, %v293
      %v296 = vmul.f32 %v264, %v293
      %v297 = vmul.f32 %v265, %v293
      %v298 = vmul.f32 %v266, %v293
      %v299 = vmul.f32 %v267, %v293
      %v300 = vmul.f32 %v268, %v293
      %v301 = vmul.f32 %v269, %v293
      %v302 = vmul.f32 %v270, %v293
      %v303 = vmul.f32 %v271, %v293
      %v304 = vmul.f32 %v272, %v293
      %v305 = vmul.f32 %v273, %v293
      %v306 = vmul.f32 %v274, %v293
      %v307 = vmul.f32 %v275, %v293
      %v308 = vmul.f32 %v276, %v293
      %v309 = vmul.f32 %v277, %v293
      %v310 = vmul.f32 %v278, %v293
      %v311 = vmul.f32 %v279, %v293
      %v312 = vmul.f32 %v280, %v293
      %v313 = vmul.f32 %v281, %v293
      %v314 = vmul.f32 %v282, %v293
      %v315 = vmul.f32 %v283, %v293
      %v316 = vmul.f32 %v284, %v293
      %v317 = vmul.f32 %v285, %v293
      %v318 = vmul.f32 %v286, %v293
      %v319 = vmul.f32 %v287, %v293
      %v320 = vmul.f32 %v288, %v293
      %v321 = vmul.f32 %v289, %v293
      %v322 = vadd.f32 %v234, %v294
      %v323 = vadd.f32 %v235, %v295
      %v324 = vadd.f32 %v236, %v296
      %v325 = vadd.f32 %v237, %v297
      %v326 = vadd.f32 %v238, %v298
      %v327 = vadd.f32 %v239, %v299
      %v328 = vadd.f32 %v240, %v300
      %v329 = vadd.f32 %v241, %v301
      %v330 = vadd.f32 %v242, %v302
      %v331 = vadd.f32 %v243, %v303
      %v332 = vadd.f32 %v244, %v304
      %v333 = vadd.f32 %v245, %v305
      %v334 = vadd.f32 %v246, %v306
      %v335 = vadd.f32 %v247, %v307
      %v336 = vadd.f32 %v248, %v308
      %v337 = vadd.f32 %v249, %v309
      %v338 = vadd.f32 %v250, %v310
      %v339 = vadd.f32 %v251, %v311
      %v340 = vadd.f32 %v252, %v312
      %v341 = vadd.f32 %v253, %v313
      %v342 = vadd.f32 %v254, %v314
      %v343 = vadd.f32 %v255, %v315
      %v344 = vadd.f32 %v256, %v316
      %v345 = vadd.f32 %v257, %v317
      %v346 = vadd.f32 %v258, %v318
      %v347 = vadd.f32 %v259, %v319
      %v348 = vadd.f32 %v260, %v320
      %v349 = vadd.f32 %v261, %v321
      %v350 = vld [vmem:[%s201 + $0x2] sm:$0xff]
      %v351 = vld [vmem:[%s201 + $0xa] sm:$0x3f]
      %v352 = vld [vmem:[%s201 + $0x12] sm:$0xff]
      %v353 = vld [vmem:[%s201 + $0x1a] sm:$0x3f]
      %v354 = vld [vmem:[%s201 + $0x22] sm:$0xff]
      %v355 = vld [vmem:[%s201 + $0x2a] sm:$0x3f]
      %v356 = vld [vmem:[%s201 + $0x32] sm:$0xff]
      %v357 = vld [vmem:[%s201 + $0x3a] sm:$0x3f]
      %v358 = vld [vmem:[%s201 + $0x42] sm:$0xff]
      %v359 = vld [vmem:[%s201 + $0x4a] sm:$0x3f]
      %v360 = vld [vmem:[%s201 + $0x52] sm:$0xff]
      %v361 = vld [vmem:[%s201 + $0x5a] sm:$0x3f]
      %v362 = vld [vmem:[%s201 + $0x62] sm:$0xff]
      %v363 = vld [vmem:[%s201 + $0x6a] sm:$0x3f]
      %v364 = vld [vmem:[%s201 + $0x72] sm:$0xff]
      %v365 = vld [vmem:[%s201 + $0x7a] sm:$0x3f]
      %v366 = vld [vmem:[%s201 + $0x82] sm:$0xff]
      %v367 = vld [vmem:[%s201 + $0x8a] sm:$0x3f]
      %v368 = vld [vmem:[%s201 + $0x92] sm:$0xff]
      %v369 = vld [vmem:[%s201 + $0x9a] sm:$0x3f]
      %v370 = vld [vmem:[%s201 + $0xa2] sm:$0xff]
      %v371 = vld [vmem:[%s201 + $0xaa] sm:$0x3f]
      %v372 = vld [vmem:[%s201 + $0xb2] sm:$0xff]
      %v373 = vld [vmem:[%s201 + $0xba] sm:$0x3f]
      %v374 = vld [vmem:[%s201 + $0xc2] sm:$0xff]
      %v375 = vld [vmem:[%s201 + $0xca] sm:$0x3f]
      %v376 = vld [vmem:[%s201 + $0xd2] sm:$0xff]
      %v377 = vld [vmem:[%s201 + $0xda] sm:$0x3f]
      %v378 = vlaneseq
      %v379 = vshrl.u32 %v378, 7
      %v380 = vsub.s32 2, %v379
      %v381 = vrot.slane %v196, %v380
      %v382 = vmul.f32 %v350, %v381
      %v383 = vmul.f32 %v351, %v381
      %v384 = vmul.f32 %v352, %v381
      %v385 = vmul.f32 %v353, %v381
      %v386 = vmul.f32 %v354, %v381
      %v387 = vmul.f32 %v355, %v381
      %v388 = vmul.f32 %v356, %v381
      %v389 = vmul.f32 %v357, %v381
      %v390 = vmul.f32 %v358, %v381
      %v391 = vmul.f32 %v359, %v381
      %v392 = vmul.f32 %v360, %v381
      %v393 = vmul.f32 %v361, %v381
      %v394 = vmul.f32 %v362, %v381
      %v395 = vmul.f32 %v363, %v381
      %v396 = vmul.f32 %v364, %v381
      %v397 = vmul.f32 %v365, %v381
      %v398 = vmul.f32 %v366, %v381
      %v399 = vmul.f32 %v367, %v381
      %v400 = vmul.f32 %v368, %v381
      %v401 = vmul.f32 %v369, %v381
      %v402 = vmul.f32 %v370, %v381
      %v403 = vmul.f32 %v371, %v381
      %v404 = vmul.f32 %v372, %v381
      %v405 = vmul.f32 %v373, %v381
      %v406 = vmul.f32 %v374, %v381
      %v407 = vmul.f32 %v375, %v381
      %v408 = vmul.f32 %v376, %v381
      %v409 = vmul.f32 %v377, %v381
      %v410 = vadd.f32 %v322, %v382
      %v411 = vadd.f32 %v323, %v383
      %v412 = vadd.f32 %v324, %v384
      %v413 = vadd.f32 %v325, %v385
      %v414 = vadd.f32 %v326, %v386
      %v415 = vadd.f32 %v327, %v387
      %v416 = vadd.f32 %v328, %v388
      %v417 = vadd.f32 %v329, %v389
      %v418 = vadd.f32 %v330, %v390
      %v419 = vadd.f32 %v331, %v391
      %v420 = vadd.f32 %v332, %v392
      %v421 = vadd.f32 %v333, %v393
      %v422 = vadd.f32 %v334, %v394
      %v423 = vadd.f32 %v335, %v395
      %v424 = vadd.f32 %v336, %v396
      %v425 = vadd.f32 %v337, %v397
      %v426 = vadd.f32 %v338, %v398
      %v427 = vadd.f32 %v339, %v399
      %v428 = vadd.f32 %v340, %v400
      %v429 = vadd.f32 %v341, %v401
      %v430 = vadd.f32 %v342, %v402
      %v431 = vadd.f32 %v343, %v403
      %v432 = vadd.f32 %v344, %v404
      %v433 = vadd.f32 %v345, %v405
      %v434 = vadd.f32 %v346, %v406
      %v435 = vadd.f32 %v347, %v407
      %v436 = vadd.f32 %v348, %v408
      %v437 = vadd.f32 %v349, %v409
      %s438 = sadd.s32 %s199, 1
      %s439 = smul.u32 %s438, 16
      %s440 = scalar_lea.vmem %s184, %s439
      %v441 = vld [vmem:[%s440] sm:$0xff]
      %v442 = vld [vmem:[%s440 + $0x8] sm:$0x3f]
      %v443 = vld [vmem:[%s440 + $0x10] sm:$0xff]
      %v444 = vld [vmem:[%s440 + $0x18] sm:$0x3f]
      %v445 = vld [vmem:[%s440 + $0x20] sm:$0xff]
      %v446 = vld [vmem:[%s440 + $0x28] sm:$0x3f]
      %v447 = vld [vmem:[%s440 + $0x30] sm:$0xff]
      %v448 = vld [vmem:[%s440 + $0x38] sm:$0x3f]
      %v449 = vld [vmem:[%s440 + $0x40] sm:$0xff]
      %v450 = vld [vmem:[%s440 + $0x48] sm:$0x3f]
      %v451 = vld [vmem:[%s440 + $0x50] sm:$0xff]
      %v452 = vld [vmem:[%s440 + $0x58] sm:$0x3f]
      %v453 = vld [vmem:[%s440 + $0x60] sm:$0xff]
      %v454 = vld [vmem:[%s440 + $0x68] sm:$0x3f]
      %v455 = vld [vmem:[%s440 + $0x70] sm:$0xff]
      %v456 = vld [vmem:[%s440 + $0x78] sm:$0x3f]
      %v457 = vld [vmem:[%s440 + $0x80] sm:$0xff]
      %v458 = vld [vmem:[%s440 + $0x88] sm:$0x3f]
      %v459 = vld [vmem:[%s440 + $0x90] sm:$0xff]
      %v460 = vld [vmem:[%s440 + $0x98] sm:$0x3f]
      %v461 = vld [vmem:[%s440 + $0xa0] sm:$0xff]
      %v462 = vld [vmem:[%s440 + $0xa8] sm:$0x3f]
      %v463 = vld [vmem:[%s440 + $0xb0] sm:$0xff]
      %v464 = vld [vmem:[%s440 + $0xb8] sm:$0x3f]
      %v465 = vld [vmem:[%s440 + $0xc0] sm:$0xff]
      %v466 = vld [vmem:[%s440 + $0xc8] sm:$0x3f]
      %v467 = vld [vmem:[%s440 + $0xd0] sm:$0xff]
      %v468 = vld [vmem:[%s440 + $0xd8] sm:$0x3f]
      %v469 = vlaneseq
      %v470 = vshrl.u32 %v469, 7
      %v471 = vsub.s32 3, %v470
      %v472 = vrot.slane %v196, %v471
      %v473 = vmul.f32 %v441, %v472
      %v474 = vmul.f32 %v442, %v472
      %v475 = vmul.f32 %v443, %v472
      %v476 = vmul.f32 %v444, %v472
      %v477 = vmul.f32 %v445, %v472
      %v478 = vmul.f32 %v446, %v472
      %v479 = vmul.f32 %v447, %v472
      %v480 = vmul.f32 %v448, %v472
      %v481 = vmul.f32 %v449, %v472
      %v482 = vmul.f32 %v450, %v472
      %v483 = vmul.f32 %v451, %v472
      %v484 = vmul.f32 %v452, %v472
      %v485 = vmul.f32 %v453, %v472
      %v486 = vmul.f32 %v454, %v472
      %v487 = vmul.f32 %v455, %v472
      %v488 = vmul.f32 %v456, %v472
      %v489 = vmul.f32 %v457, %v472
      %v490 = vmul.f32 %v458, %v472
      %v491 = vmul.f32 %v459, %v472
      %v492 = vmul.f32 %v460, %v472
      %v493 = vmul.f32 %v461, %v472
      %v494 = vmul.f32 %v462, %v472
      %v495 = vmul.f32 %v463, %v472
      %v496 = vmul.f32 %v464, %v472
      %v497 = vmul.f32 %v465, %v472
      %v498 = vmul.f32 %v466, %v472
      %v499 = vmul.f32 %v467, %v472
      %v500 = vmul.f32 %v468, %v472
      %v501 = vadd.f32 %v410, %v473
      %v502 = vadd.f32 %v411, %v474
      %v503 = vadd.f32 %v412, %v475
      %v504 = vadd.f32 %v413, %v476
      %v505 = vadd.f32 %v414, %v477
      %v506 = vadd.f32 %v415, %v478
      %v507 = vadd.f32 %v416, %v479
      %v508 = vadd.f32 %v417, %v480
      %v509 = vadd.f32 %v418, %v481
      %v510 = vadd.f32 %v419, %v482
      %v511 = vadd.f32 %v420, %v483
      %v512 = vadd.f32 %v421, %v484
      %v513 = vadd.f32 %v422, %v485
      %v514 = vadd.f32 %v423, %v486
      %v515 = vadd.f32 %v424, %v487
      %v516 = vadd.f32 %v425, %v488
      %v517 = vadd.f32 %v426, %v489
      %v518 = vadd.f32 %v427, %v490
      %v519 = vadd.f32 %v428, %v491
      %v520 = vadd.f32 %v429, %v492
      %v521 = vadd.f32 %v430, %v493
      %v522 = vadd.f32 %v431, %v494
      %v523 = vadd.f32 %v432, %v495
      %v524 = vadd.f32 %v433, %v496
      %v525 = vadd.f32 %v434, %v497
      %v526 = vadd.f32 %v435, %v498
      %v527 = vadd.f32 %v436, %v499
      %v528 = vadd.f32 %v437, %v500
      %v529 = vld [vmem:[%s440 + $0x1] sm:$0xff]
      %v530 = vld [vmem:[%s440 + $0x9] sm:$0x3f]
      %v531 = vld [vmem:[%s440 + $0x11] sm:$0xff]
      %v532 = vld [vmem:[%s440 + $0x19] sm:$0x3f]
      %v533 = vld [vmem:[%s440 + $0x21] sm:$0xff]
      %v534 = vld [vmem:[%s440 + $0x29] sm:$0x3f]
      %v535 = vld [vmem:[%s440 + $0x31] sm:$0xff]
      %v536 = vld [vmem:[%s440 + $0x39] sm:$0x3f]
      %v537 = vld [vmem:[%s440 + $0x41] sm:$0xff]
      %v538 = vld [vmem:[%s440 + $0x49] sm:$0x3f]
      %v539 = vld [vmem:[%s440 + $0x51] sm:$0xff]
      %v540 = vld [vmem:[%s440 + $0x59] sm:$0x3f]
      %v541 = vld [vmem:[%s440 + $0x61] sm:$0xff]
      %v542 = vld [vmem:[%s440 + $0x69] sm:$0x3f]
      %v543 = vld [vmem:[%s440 + $0x71] sm:$0xff]
      %v544 = vld [vmem:[%s440 + $0x79] sm:$0x3f]
      %v545 = vld [vmem:[%s440 + $0x81] sm:$0xff]
      %v546 = vld [vmem:[%s440 + $0x89] sm:$0x3f]
      %v547 = vld [vmem:[%s440 + $0x91] sm:$0xff]
      %v548 = vld [vmem:[%s440 + $0x99] sm:$0x3f]
      %v549 = vld [vmem:[%s440 + $0xa1] sm:$0xff]
      %v550 = vld [vmem:[%s440 + $0xa9] sm:$0x3f]
      %v551 = vld [vmem:[%s440 + $0xb1] sm:$0xff]
      %v552 = vld [vmem:[%s440 + $0xb9] sm:$0x3f]
      %v553 = vld [vmem:[%s440 + $0xc1] sm:$0xff]
      %v554 = vld [vmem:[%s440 + $0xc9] sm:$0x3f]
      %v555 = vld [vmem:[%s440 + $0xd1] sm:$0xff]
      %v556 = vld [vmem:[%s440 + $0xd9] sm:$0x3f]
      %v557 = vlaneseq
      %v558 = vshrl.u32 %v557, 7
      %v559 = vsub.s32 4, %v558
      %v560 = vrot.slane %v196, %v559
      %v561 = vmul.f32 %v529, %v560
      %v562 = vmul.f32 %v530, %v560
      %v563 = vmul.f32 %v531, %v560
      %v564 = vmul.f32 %v532, %v560
      %v565 = vmul.f32 %v533, %v560
      %v566 = vmul.f32 %v534, %v560
      %v567 = vmul.f32 %v535, %v560
      %v568 = vmul.f32 %v536, %v560
      %v569 = vmul.f32 %v537, %v560
      %v570 = vmul.f32 %v538, %v560
      %v571 = vmul.f32 %v539, %v560
      %v572 = vmul.f32 %v540, %v560
      %v573 = vmul.f32 %v541, %v560
      %v574 = vmul.f32 %v542, %v560
      %v575 = vmul.f32 %v543, %v560
      %v576 = vmul.f32 %v544, %v560
      %v577 = vmul.f32 %v545, %v560
      %v578 = vmul.f32 %v546, %v560
      %v579 = vmul.f32 %v547, %v560
      %v580 = vmul.f32 %v548, %v560
      %v581 = vmul.f32 %v549, %v560
      %v582 = vmul.f32 %v550, %v560
      %v583 = vmul.f32 %v551, %v560
      %v584 = vmul.f32 %v552, %v560
      %v585 = vmul.f32 %v553, %v560
      %v586 = vmul.f32 %v554, %v560
      %v587 = vmul.f32 %v555, %v560
      %v588 = vmul.f32 %v556, %v560
      %v589 = vadd.f32 %v501, %v561
      %v590 = vadd.f32 %v502, %v562
      %v591 = vadd.f32 %v503, %v563
      %v592 = vadd.f32 %v504, %v564
      %v593 = vadd.f32 %v505, %v565
      %v594 = vadd.f32 %v506, %v566
      %v595 = vadd.f32 %v507, %v567
      %v596 = vadd.f32 %v508, %v568
      %v597 = vadd.f32 %v509, %v569
      %v598 = vadd.f32 %v510, %v570
      %v599 = vadd.f32 %v511, %v571
      %v600 = vadd.f32 %v512, %v572
      %v601 = vadd.f32 %v513, %v573
      %v602 = vadd.f32 %v514, %v574
      %v603 = vadd.f32 %v515, %v575
      %v604 = vadd.f32 %v516, %v576
      %v605 = vadd.f32 %v517, %v577
      %v606 = vadd.f32 %v518, %v578
      %v607 = vadd.f32 %v519, %v579
      %v608 = vadd.f32 %v520, %v580
      %v609 = vadd.f32 %v521, %v581
      %v610 = vadd.f32 %v522, %v582
      %v611 = vadd.f32 %v523, %v583
      %v612 = vadd.f32 %v524, %v584
      %v613 = vadd.f32 %v525, %v585
      %v614 = vadd.f32 %v526, %v586
      %v615 = vadd.f32 %v527, %v587
      %v616 = vadd.f32 %v528, %v588
      %v617 = vld [vmem:[%s440 + $0x2] sm:$0xff]
      %v618 = vld [vmem:[%s440 + $0xa] sm:$0x3f]
      %v619 = vld [vmem:[%s440 + $0x12] sm:$0xff]
      %v620 = vld [vmem:[%s440 + $0x1a] sm:$0x3f]
      %v621 = vld [vmem:[%s440 + $0x22] sm:$0xff]
      %v622 = vld [vmem:[%s440 + $0x2a] sm:$0x3f]
      %v623 = vld [vmem:[%s440 + $0x32] sm:$0xff]
      %v624 = vld [vmem:[%s440 + $0x3a] sm:$0x3f]
      %v625 = vld [vmem:[%s440 + $0x42] sm:$0xff]
      %v626 = vld [vmem:[%s440 + $0x4a] sm:$0x3f]
      %v627 = vld [vmem:[%s440 + $0x52] sm:$0xff]
      %v628 = vld [vmem:[%s440 + $0x5a] sm:$0x3f]
      %v629 = vld [vmem:[%s440 + $0x62] sm:$0xff]
      %v630 = vld [vmem:[%s440 + $0x6a] sm:$0x3f]
      %v631 = vld [vmem:[%s440 + $0x72] sm:$0xff]
      %v632 = vld [vmem:[%s440 + $0x7a] sm:$0x3f]
      %v633 = vld [vmem:[%s440 + $0x82] sm:$0xff]
      %v634 = vld [vmem:[%s440 + $0x8a] sm:$0x3f]
      %v635 = vld [vmem:[%s440 + $0x92] sm:$0xff]
      %v636 = vld [vmem:[%s440 + $0x9a] sm:$0x3f]
      %v637 = vld [vmem:[%s440 + $0xa2] sm:$0xff]
      %v638 = vld [vmem:[%s440 + $0xaa] sm:$0x3f]
      %v639 = vld [vmem:[%s440 + $0xb2] sm:$0xff]
      %v640 = vld [vmem:[%s440 + $0xba] sm:$0x3f]
      %v641 = vld [vmem:[%s440 + $0xc2] sm:$0xff]
      %v642 = vld [vmem:[%s440 + $0xca] sm:$0x3f]
      %v643 = vld [vmem:[%s440 + $0xd2] sm:$0xff]
      %v644 = vld [vmem:[%s440 + $0xda] sm:$0x3f]
      %v645 = vlaneseq
      %v646 = vshrl.u32 %v645, 7
      %v647 = vsub.s32 5, %v646
      %v648 = vrot.slane %v196, %v647
      %v649 = vmul.f32 %v617, %v648
      %v650 = vmul.f32 %v618, %v648
      %v651 = vmul.f32 %v619, %v648
      %v652 = vmul.f32 %v620, %v648
      %v653 = vmul.f32 %v621, %v648
      %v654 = vmul.f32 %v622, %v648
      %v655 = vmul.f32 %v623, %v648
      %v656 = vmul.f32 %v624, %v648
      %v657 = vmul.f32 %v625, %v648
      %v658 = vmul.f32 %v626, %v648
      %v659 = vmul.f32 %v627, %v648
      %v660 = vmul.f32 %v628, %v648
      %v661 = vmul.f32 %v629, %v648
      %v662 = vmul.f32 %v630, %v648
      %v663 = vmul.f32 %v631, %v648
      %v664 = vmul.f32 %v632, %v648
      %v665 = vmul.f32 %v633, %v648
      %v666 = vmul.f32 %v634, %v648
      %v667 = vmul.f32 %v635, %v648
      %v668 = vmul.f32 %v636, %v648
      %v669 = vmul.f32 %v637, %v648
      %v670 = vmul.f32 %v638, %v648
      %v671 = vmul.f32 %v639, %v648
      %v672 = vmul.f32 %v640, %v648
      %v673 = vmul.f32 %v641, %v648
      %v674 = vmul.f32 %v642, %v648
      %v675 = vmul.f32 %v643, %v648
      %v676 = vmul.f32 %v644, %v648
      %v677 = vadd.f32 %v589, %v649
      %v678 = vadd.f32 %v590, %v650
      %v679 = vadd.f32 %v591, %v651
      %v680 = vadd.f32 %v592, %v652
      %v681 = vadd.f32 %v593, %v653
      %v682 = vadd.f32 %v594, %v654
      %v683 = vadd.f32 %v595, %v655
      %v684 = vadd.f32 %v596, %v656
      %v685 = vadd.f32 %v597, %v657
      %v686 = vadd.f32 %v598, %v658
      %v687 = vadd.f32 %v599, %v659
      %v688 = vadd.f32 %v600, %v660
      %v689 = vadd.f32 %v601, %v661
      %v690 = vadd.f32 %v602, %v662
      %v691 = vadd.f32 %v603, %v663
      %v692 = vadd.f32 %v604, %v664
      %v693 = vadd.f32 %v605, %v665
      %v694 = vadd.f32 %v606, %v666
      %v695 = vadd.f32 %v607, %v667
      %v696 = vadd.f32 %v608, %v668
      %v697 = vadd.f32 %v609, %v669
      %v698 = vadd.f32 %v610, %v670
      %v699 = vadd.f32 %v611, %v671
      %v700 = vadd.f32 %v612, %v672
      %v701 = vadd.f32 %v613, %v673
      %v702 = vadd.f32 %v614, %v674
      %v703 = vadd.f32 %v615, %v675
      %v704 = vadd.f32 %v616, %v676
      %s705 = sadd.s32 %s199, 2
      %s706 = smul.u32 %s705, 16
      %s707 = scalar_lea.vmem %s184, %s706
      %v708 = vld [vmem:[%s707] sm:$0xff]
      %v709 = vld [vmem:[%s707 + $0x8] sm:$0x3f]
      %v710 = vld [vmem:[%s707 + $0x10] sm:$0xff]
      %v711 = vld [vmem:[%s707 + $0x18] sm:$0x3f]
      %v712 = vld [vmem:[%s707 + $0x20] sm:$0xff]
      %v713 = vld [vmem:[%s707 + $0x28] sm:$0x3f]
      %v714 = vld [vmem:[%s707 + $0x30] sm:$0xff]
      %v715 = vld [vmem:[%s707 + $0x38] sm:$0x3f]
      %v716 = vld [vmem:[%s707 + $0x40] sm:$0xff]
      %v717 = vld [vmem:[%s707 + $0x48] sm:$0x3f]
      %v718 = vld [vmem:[%s707 + $0x50] sm:$0xff]
      %v719 = vld [vmem:[%s707 + $0x58] sm:$0x3f]
      %v720 = vld [vmem:[%s707 + $0x60] sm:$0xff]
      %v721 = vld [vmem:[%s707 + $0x68] sm:$0x3f]
      %v722 = vld [vmem:[%s707 + $0x70] sm:$0xff]
      %v723 = vld [vmem:[%s707 + $0x78] sm:$0x3f]
      %v724 = vld [vmem:[%s707 + $0x80] sm:$0xff]
      %v725 = vld [vmem:[%s707 + $0x88] sm:$0x3f]
      %v726 = vld [vmem:[%s707 + $0x90] sm:$0xff]
      %v727 = vld [vmem:[%s707 + $0x98] sm:$0x3f]
      %v728 = vld [vmem:[%s707 + $0xa0] sm:$0xff]
      %v729 = vld [vmem:[%s707 + $0xa8] sm:$0x3f]
      %v730 = vld [vmem:[%s707 + $0xb0] sm:$0xff]
      %v731 = vld [vmem:[%s707 + $0xb8] sm:$0x3f]
      %v732 = vld [vmem:[%s707 + $0xc0] sm:$0xff]
      %v733 = vld [vmem:[%s707 + $0xc8] sm:$0x3f]
      %v734 = vld [vmem:[%s707 + $0xd0] sm:$0xff]
      %v735 = vld [vmem:[%s707 + $0xd8] sm:$0x3f]
      %v736 = vlaneseq
      %v737 = vshrl.u32 %v736, 7
      %v738 = vsub.s32 6, %v737
      %v739 = vrot.slane %v196, %v738
      %v740 = vmul.f32 %v708, %v739
      %v741 = vmul.f32 %v709, %v739
      %v742 = vmul.f32 %v710, %v739
      %v743 = vmul.f32 %v711, %v739
      %v744 = vmul.f32 %v712, %v739
      %v745 = vmul.f32 %v713, %v739
      %v746 = vmul.f32 %v714, %v739
      %v747 = vmul.f32 %v715, %v739
      %v748 = vmul.f32 %v716, %v739
      %v749 = vmul.f32 %v717, %v739
      %v750 = vmul.f32 %v718, %v739
      %v751 = vmul.f32 %v719, %v739
      %v752 = vmul.f32 %v720, %v739
      %v753 = vmul.f32 %v721, %v739
      %v754 = vmul.f32 %v722, %v739
      %v755 = vmul.f32 %v723, %v739
      %v756 = vmul.f32 %v724, %v739
      %v757 = vmul.f32 %v725, %v739
      %v758 = vmul.f32 %v726, %v739
      %v759 = vmul.f32 %v727, %v739
      %v760 = vmul.f32 %v728, %v739
      %v761 = vmul.f32 %v729, %v739
      %v762 = vmul.f32 %v730, %v739
      %v763 = vmul.f32 %v731, %v739
      %v764 = vmul.f32 %v732, %v739
      %v765 = vmul.f32 %v733, %v739
      %v766 = vmul.f32 %v734, %v739
      %v767 = vmul.f32 %v735, %v739
      %v768 = vadd.f32 %v677, %v740
      %v769 = vadd.f32 %v678, %v741
      %v770 = vadd.f32 %v679, %v742
      %v771 = vadd.f32 %v680, %v743
      %v772 = vadd.f32 %v681, %v744
      %v773 = vadd.f32 %v682, %v745
      %v774 = vadd.f32 %v683, %v746
      %v775 = vadd.f32 %v684, %v747
      %v776 = vadd.f32 %v685, %v748
      %v777 = vadd.f32 %v686, %v749
      %v778 = vadd.f32 %v687, %v750
      %v779 = vadd.f32 %v688, %v751
      %v780 = vadd.f32 %v689, %v752
      %v781 = vadd.f32 %v690, %v753
      %v782 = vadd.f32 %v691, %v754
      %v783 = vadd.f32 %v692, %v755
      %v784 = vadd.f32 %v693, %v756
      %v785 = vadd.f32 %v694, %v757
      %v786 = vadd.f32 %v695, %v758
      %v787 = vadd.f32 %v696, %v759
      %v788 = vadd.f32 %v697, %v760
      %v789 = vadd.f32 %v698, %v761
      %v790 = vadd.f32 %v699, %v762
      %v791 = vadd.f32 %v700, %v763
      %v792 = vadd.f32 %v701, %v764
      %v793 = vadd.f32 %v702, %v765
      %v794 = vadd.f32 %v703, %v766
      %v795 = vadd.f32 %v704, %v767
      %v796 = vld [vmem:[%s707 + $0x1] sm:$0xff]
      %v797 = vld [vmem:[%s707 + $0x9] sm:$0x3f]
      %v798 = vld [vmem:[%s707 + $0x11] sm:$0xff]
      %v799 = vld [vmem:[%s707 + $0x19] sm:$0x3f]
      %v800 = vld [vmem:[%s707 + $0x21] sm:$0xff]
      %v801 = vld [vmem:[%s707 + $0x29] sm:$0x3f]
      %v802 = vld [vmem:[%s707 + $0x31] sm:$0xff]
      %v803 = vld [vmem:[%s707 + $0x39] sm:$0x3f]
      %v804 = vld [vmem:[%s707 + $0x41] sm:$0xff]
      %v805 = vld [vmem:[%s707 + $0x49] sm:$0x3f]
      %v806 = vld [vmem:[%s707 + $0x51] sm:$0xff]
      %v807 = vld [vmem:[%s707 + $0x59] sm:$0x3f]
      %v808 = vld [vmem:[%s707 + $0x61] sm:$0xff]
      %v809 = vld [vmem:[%s707 + $0x69] sm:$0x3f]
      %v810 = vld [vmem:[%s707 + $0x71] sm:$0xff]
      %v811 = vld [vmem:[%s707 + $0x79] sm:$0x3f]
      %v812 = vld [vmem:[%s707 + $0x81] sm:$0xff]
      %v813 = vld [vmem:[%s707 + $0x89] sm:$0x3f]
      %v814 = vld [vmem:[%s707 + $0x91] sm:$0xff]
      %v815 = vld [vmem:[%s707 + $0x99] sm:$0x3f]
      %v816 = vld [vmem:[%s707 + $0xa1] sm:$0xff]
      %v817 = vld [vmem:[%s707 + $0xa9] sm:$0x3f]
      %v818 = vld [vmem:[%s707 + $0xb1] sm:$0xff]
      %v819 = vld [vmem:[%s707 + $0xb9] sm:$0x3f]
      %v820 = vld [vmem:[%s707 + $0xc1] sm:$0xff]
      %v821 = vld [vmem:[%s707 + $0xc9] sm:$0x3f]
      %v822 = vld [vmem:[%s707 + $0xd1] sm:$0xff]
      %v823 = vld [vmem:[%s707 + $0xd9] sm:$0x3f]
      %v824 = vlaneseq
      %v825 = vshrl.u32 %v824, 7
      %v826 = vsub.s32 7, %v825
      %v827 = vrot.slane %v196, %v826
      %v828 = vmul.f32 %v796, %v827
      %v829 = vmul.f32 %v797, %v827
      %v830 = vmul.f32 %v798, %v827
      %v831 = vmul.f32 %v799, %v827
      %v832 = vmul.f32 %v800, %v827
      %v833 = vmul.f32 %v801, %v827
      %v834 = vmul.f32 %v802, %v827
      %v835 = vmul.f32 %v803, %v827
      %v836 = vmul.f32 %v804, %v827
      %v837 = vmul.f32 %v805, %v827
      %v838 = vmul.f32 %v806, %v827
      %v839 = vmul.f32 %v807, %v827
      %v840 = vmul.f32 %v808, %v827
      %v841 = vmul.f32 %v809, %v827
      %v842 = vmul.f32 %v810, %v827
      %v843 = vmul.f32 %v811, %v827
      %v844 = vmul.f32 %v812, %v827
      %v845 = vmul.f32 %v813, %v827
      %v846 = vmul.f32 %v814, %v827
      %v847 = vmul.f32 %v815, %v827
      %v848 = vmul.f32 %v816, %v827
      %v849 = vmul.f32 %v817, %v827
      %v850 = vmul.f32 %v818, %v827
      %v851 = vmul.f32 %v819, %v827
      %v852 = vmul.f32 %v820, %v827
      %v853 = vmul.f32 %v821, %v827
      %v854 = vmul.f32 %v822, %v827
      %v855 = vmul.f32 %v823, %v827
      %v856 = vadd.f32 %v768, %v828
      %v857 = vadd.f32 %v769, %v829
      %v858 = vadd.f32 %v770, %v830
      %v859 = vadd.f32 %v771, %v831
      %v860 = vadd.f32 %v772, %v832
      %v861 = vadd.f32 %v773, %v833
      %v862 = vadd.f32 %v774, %v834
      %v863 = vadd.f32 %v775, %v835
      %v864 = vadd.f32 %v776, %v836
      %v865 = vadd.f32 %v777, %v837
      %v866 = vadd.f32 %v778, %v838
      %v867 = vadd.f32 %v779, %v839
      %v868 = vadd.f32 %v780, %v840
      %v869 = vadd.f32 %v781, %v841
      %v870 = vadd.f32 %v782, %v842
      %v871 = vadd.f32 %v783, %v843
      %v872 = vadd.f32 %v784, %v844
      %v873 = vadd.f32 %v785, %v845
      %v874 = vadd.f32 %v786, %v846
      %v875 = vadd.f32 %v787, %v847
      %v876 = vadd.f32 %v788, %v848
      %v877 = vadd.f32 %v789, %v849
      %v878 = vadd.f32 %v790, %v850
      %v879 = vadd.f32 %v791, %v851
      %v880 = vadd.f32 %v792, %v852
      %v881 = vadd.f32 %v793, %v853
      %v882 = vadd.f32 %v794, %v854
      %v883 = vadd.f32 %v795, %v855
      %v884 = vld [vmem:[%s707 + $0x2] sm:$0xff]
      %v885 = vld [vmem:[%s707 + $0xa] sm:$0x3f]
      %v886 = vld [vmem:[%s707 + $0x12] sm:$0xff]
      %v887 = vld [vmem:[%s707 + $0x1a] sm:$0x3f]
      %v888 = vld [vmem:[%s707 + $0x22] sm:$0xff]
      %v889 = vld [vmem:[%s707 + $0x2a] sm:$0x3f]
      %v890 = vld [vmem:[%s707 + $0x32] sm:$0xff]
      %v891 = vld [vmem:[%s707 + $0x3a] sm:$0x3f]
      %v892 = vld [vmem:[%s707 + $0x42] sm:$0xff]
      %v893 = vld [vmem:[%s707 + $0x4a] sm:$0x3f]
      %v894 = vld [vmem:[%s707 + $0x52] sm:$0xff]
      %v895 = vld [vmem:[%s707 + $0x5a] sm:$0x3f]
      %v896 = vld [vmem:[%s707 + $0x62] sm:$0xff]
      %v897 = vld [vmem:[%s707 + $0x6a] sm:$0x3f]
      %v898 = vld [vmem:[%s707 + $0x72] sm:$0xff]
      %v899 = vld [vmem:[%s707 + $0x7a] sm:$0x3f]
      %v900 = vld [vmem:[%s707 + $0x82] sm:$0xff]
      %v901 = vld [vmem:[%s707 + $0x8a] sm:$0x3f]
      %v902 = vld [vmem:[%s707 + $0x92] sm:$0xff]
      %v903 = vld [vmem:[%s707 + $0x9a] sm:$0x3f]
      %v904 = vld [vmem:[%s707 + $0xa2] sm:$0xff]
      %v905 = vld [vmem:[%s707 + $0xaa] sm:$0x3f]
      %v906 = vld [vmem:[%s707 + $0xb2] sm:$0xff]
      %v907 = vld [vmem:[%s707 + $0xba] sm:$0x3f]
      %v908 = vld [vmem:[%s707 + $0xc2] sm:$0xff]
      %v909 = vld [vmem:[%s707 + $0xca] sm:$0x3f]
      %v910 = vld [vmem:[%s707 + $0xd2] sm:$0xff]
      %v911 = vld [vmem:[%s707 + $0xda] sm:$0x3f]
      %v912 = vlaneseq
      %v913 = vshrl.u32 %v912, 7
      %v914 = vsub.s32 0, %v913
      %v915 = vrot.slane %v197, %v914
      %v916 = vmul.f32 %v884, %v915
      %v917 = vmul.f32 %v885, %v915
      %v918 = vmul.f32 %v886, %v915
      %v919 = vmul.f32 %v887, %v915
      %v920 = vmul.f32 %v888, %v915
      %v921 = vmul.f32 %v889, %v915
      %v922 = vmul.f32 %v890, %v915
      %v923 = vmul.f32 %v891, %v915
      %v924 = vmul.f32 %v892, %v915
      %v925 = vmul.f32 %v893, %v915
      %v926 = vmul.f32 %v894, %v915
      %v927 = vmul.f32 %v895, %v915
      %v928 = vmul.f32 %v896, %v915
      %v929 = vmul.f32 %v897, %v915
      %v930 = vmul.f32 %v898, %v915
      %v931 = vmul.f32 %v899, %v915
      %v932 = vmul.f32 %v900, %v915
      %v933 = vmul.f32 %v901, %v915
      %v934 = vmul.f32 %v902, %v915
      %v935 = vmul.f32 %v903, %v915
      %v936 = vmul.f32 %v904, %v915
      %v937 = vmul.f32 %v905, %v915
      %v938 = vmul.f32 %v906, %v915
      %v939 = vmul.f32 %v907, %v915
      %v940 = vmul.f32 %v908, %v915
      %v941 = vmul.f32 %v909, %v915
      %v942 = vmul.f32 %v910, %v915
      %v943 = vmul.f32 %v911, %v915
      %v944 = vadd.f32 %v856, %v916
      %v945 = vadd.f32 %v857, %v917
      %v946 = vadd.f32 %v858, %v918
      %v947 = vadd.f32 %v859, %v919
      %v948 = vadd.f32 %v860, %v920
      %v949 = vadd.f32 %v861, %v921
      %v950 = vadd.f32 %v862, %v922
      %v951 = vadd.f32 %v863, %v923
      %v952 = vadd.f32 %v864, %v924
      %v953 = vadd.f32 %v865, %v925
      %v954 = vadd.f32 %v866, %v926
      %v955 = vadd.f32 %v867, %v927
      %v956 = vadd.f32 %v868, %v928
      %v957 = vadd.f32 %v869, %v929
      %v958 = vadd.f32 %v870, %v930
      %v959 = vadd.f32 %v871, %v931
      %v960 = vadd.f32 %v872, %v932
      %v961 = vadd.f32 %v873, %v933
      %v962 = vadd.f32 %v874, %v934
      %v963 = vadd.f32 %v875, %v935
      %v964 = vadd.f32 %v876, %v936
      %v965 = vadd.f32 %v877, %v937
      %v966 = vadd.f32 %v878, %v938
      %v967 = vadd.f32 %v879, %v939
      %v968 = vadd.f32 %v880, %v940
      %v969 = vadd.f32 %v881, %v941
      %v970 = vadd.f32 %v882, %v942
      %v971 = vadd.f32 %v883, %v943
      %vm972 = vcmask 31744
      %973 = vst.msk [vmem:[#allocation2] sm:$0xff] %vm972, %v944
      %vm974 = vcmask 29696
      %975 = vst.msk [vmem:[#allocation2 + $0x8] sm:$0x3f] %vm974, %v945
      %976 = vst.msk [vmem:[#allocation2 + $0x10] sm:$0xff] %vm972, %v946
      %977 = vst.msk [vmem:[#allocation2 + $0x18] sm:$0x3f] %vm974, %v947
      %978 = vst.msk [vmem:[#allocation2 + $0x20] sm:$0xff] %vm972, %v948
      %979 = vst.msk [vmem:[#allocation2 + $0x28] sm:$0x3f] %vm974, %v949
      %980 = vst.msk [vmem:[#allocation2 + $0x30] sm:$0xff] %vm972, %v950
      %981 = vst.msk [vmem:[#allocation2 + $0x38] sm:$0x3f] %vm974, %v951
      %982 = vst.msk [vmem:[#allocation2 + $0x40] sm:$0xff] %vm972, %v952
      %983 = vst.msk [vmem:[#allocation2 + $0x48] sm:$0x3f] %vm974, %v953
      %984 = vst.msk [vmem:[#allocation2 + $0x50] sm:$0xff] %vm972, %v954
      %985 = vst.msk [vmem:[#allocation2 + $0x58] sm:$0x3f] %vm974, %v955
      %986 = vst.msk [vmem:[#allocation2 + $0x60] sm:$0xff] %vm972, %v956
      %987 = vst.msk [vmem:[#allocation2 + $0x68] sm:$0x3f] %vm974, %v957
      %988 = vst.msk [vmem:[#allocation2 + $0x70] sm:$0xff] %vm972, %v958
      %989 = vst.msk [vmem:[#allocation2 + $0x78] sm:$0x3f] %vm974, %v959
      %990 = vst.msk [vmem:[#allocation2 + $0x80] sm:$0xff] %vm972, %v960
      %991 = vst.msk [vmem:[#allocation2 + $0x88] sm:$0x3f] %vm974, %v961
      %992 = vst.msk [vmem:[#allocation2 + $0x90] sm:$0xff] %vm972, %v962
      %993 = vst.msk [vmem:[#allocation2 + $0x98] sm:$0x3f] %vm974, %v963
      %994 = vst.msk [vmem:[#allocation2 + $0xa0] sm:$0xff] %vm972, %v964
      %995 = vst.msk [vmem:[#allocation2 + $0xa8] sm:$0x3f] %vm974, %v965
      %996 = vst.msk [vmem:[#allocation2 + $0xb0] sm:$0xff] %vm972, %v966
      %997 = vst.msk [vmem:[#allocation2 + $0xb8] sm:$0x3f] %vm974, %v967
      %998 = vst.msk [vmem:[#allocation2 + $0xc0] sm:$0xff] %vm972, %v968
      %999 = vst.msk [vmem:[#allocation2 + $0xc8] sm:$0x3f] %vm974, %v969
      %1000 = vst.msk [vmem:[#allocation2 + $0xd0] sm:$0xff] %vm972, %v970
      %1001 = vst.msk [vmem:[#allocation2 + $0xd8] sm:$0x3f] %vm974, %v971
      %v1002 = vld [vmem:[#allocation2] sm:$0xff]
      %v1003 = vld [vmem:[#allocation2 + $0x8] sm:$0x3f]
      %v1004 = vld [vmem:[#allocation2 + $0x10] sm:$0xff]
      %v1005 = vld [vmem:[#allocation2 + $0x18] sm:$0x3f]
      %v1006 = vld [vmem:[#allocation2 + $0x20] sm:$0xff]
      %v1007 = vld [vmem:[#allocation2 + $0x28] sm:$0x3f]
      %v1008 = vld [vmem:[#allocation2 + $0x30] sm:$0xff]
      %v1009 = vld [vmem:[#allocation2 + $0x38] sm:$0x3f]
      %v1010 = vld [vmem:[#allocation2 + $0x40] sm:$0xff]
      %v1011 = vld [vmem:[#allocation2 + $0x48] sm:$0x3f]
      %v1012 = vld [vmem:[#allocation2 + $0x50] sm:$0xff]
      %v1013 = vld [vmem:[#allocation2 + $0x58] sm:$0x3f]
      %v1014 = vld [vmem:[#allocation2 + $0x60] sm:$0xff]
      %v1015 = vld [vmem:[#allocation2 + $0x68] sm:$0x3f]
      %v1016 = vld [vmem:[#allocation2 + $0x70] sm:$0xff]
      %v1017 = vld [vmem:[#allocation2 + $0x78] sm:$0x3f]
      %v1018 = vld [vmem:[#allocation2 + $0x80] sm:$0xff]
      %v1019 = vld [vmem:[#allocation2 + $0x88] sm:$0x3f]
      %v1020 = vld [vmem:[#allocation2 + $0x90] sm:$0xff]
      %v1021 = vld [vmem:[#allocation2 + $0x98] sm:$0x3f]
      %v1022 = vld [vmem:[#allocation2 + $0xa0] sm:$0xff]
      %v1023 = vld [vmem:[#allocation2 + $0xa8] sm:$0x3f]
      %v1024 = vld [vmem:[#allocation2 + $0xb0] sm:$0xff]
      %v1025 = vld [vmem:[#allocation2 + $0xb8] sm:$0x3f]
      %v1026 = vld [vmem:[#allocation2 + $0xc0] sm:$0xff]
      %v1027 = vld [vmem:[#allocation2 + $0xc8] sm:$0x3f]
      %v1028 = vld [vmem:[#allocation2 + $0xd0] sm:$0xff]
      %v1029 = vld [vmem:[#allocation2 + $0xd8] sm:$0x3f]
      %v1058 = vcombine.high %v1002, %v1002
      %v1060 = vunpack.c.l.s4 1983009808
      %v1061 = vunpack.c.0.s8 %v1060
      %v1062 = vlaneseq
      %v1063 = vshrl.u32 %v1062, 7
      %v1064 = vsub.s32 %v1061, %v1063
      %v1065 = vrot.slane %v1002, %v1064
      %v1067 = vunpack.c.l.s4 1983009808
      %v1068 = vunpack.c.0.s8 %v1067
      %v1069 = vlaneseq
      %v1070 = vshrl.u32 %v1069, 7
      %v1071 = vsub.s32 %v1068, %v1070
      %v1072 = vrot.slane %v1058, %v1071
      %v1073 = vcombine.high %v1065, %v1065
      %v1074 = vcombine.high %v1072, %v1072
      %v1075 = vcombine.high %v1003, %v1003
      %v1077 = vunpack.c.l.s4 1983009808
      %v1078 = vunpack.c.0.s8 %v1077
      %v1079 = vlaneseq
      %v1080 = vshrl.u32 %v1079, 7
      %v1081 = vsub.s32 %v1078, %v1080
      %v1082 = vrot.slane %v1003, %v1081
      %v1084 = vunpack.c.l.s4 1983009808
      %v1085 = vunpack.c.0.s8 %v1084
      %v1086 = vlaneseq
      %v1087 = vshrl.u32 %v1086, 7
      %v1088 = vsub.s32 %v1085, %v1087
      %v1089 = vrot.slane %v1075, %v1088
      %v1090 = vcombine.high %v1082, %v1082
      %v1091 = vcombine.high %v1004, %v1004
      %v1093 = vunpack.c.l.s4 1983009808
      %v1094 = vunpack.c.0.s8 %v1093
      %v1095 = vlaneseq
      %v1096 = vshrl.u32 %v1095, 7
      %v1097 = vsub.s32 %v1094, %v1096
      %v1098 = vrot.slane %v1004, %v1097
      %v1100 = vunpack.c.l.s4 1983009808
      %v1101 = vunpack.c.0.s8 %v1100
      %v1102 = vlaneseq
      %v1103 = vshrl.u32 %v1102, 7
      %v1104 = vsub.s32 %v1101, %v1103
      %v1105 = vrot.slane %v1091, %v1104
      %v1106 = vcombine.high %v1098, %v1098
      %v1107 = vcombine.high %v1105, %v1105
      %v1108 = vcombine.high %v1005, %v1005
      %v1110 = vunpack.c.l.s4 1983009808
      %v1111 = vunpack.c.0.s8 %v1110
      %v1112 = vlaneseq
      %v1113 = vshrl.u32 %v1112, 7
      %v1114 = vsub.s32 %v1111, %v1113
      %v1115 = vrot.slane %v1005, %v1114
      %v1117 = vunpack.c.l.s4 1983009808
      %v1118 = vunpack.c.0.s8 %v1117
      %v1119 = vlaneseq
      %v1120 = vshrl.u32 %v1119, 7
      %v1121 = vsub.s32 %v1118, %v1120
      %v1122 = vrot.slane %v1108, %v1121
      %v1123 = vcombine.high %v1115, %v1115
      %v1124 = vcombine.high %v1006, %v1006
      %v1126 = vunpack.c.l.s4 1983009808
      %v1127 = vunpack.c.0.s8 %v1126
      %v1128 = vlaneseq
      %v1129 = vshrl.u32 %v1128, 7
      %v1130 = vsub.s32 %v1127, %v1129
      %v1131 = vrot.slane %v1006, %v1130
      %v1133 = vunpack.c.l.s4 1983009808
      %v1134 = vunpack.c.0.s8 %v1133
      %v1135 = vlaneseq
      %v1136 = vshrl.u32 %v1135, 7
      %v1137 = vsub.s32 %v1134, %v1136
      %v1138 = vrot.slane %v1124, %v1137
      %v1139 = vcombine.high %v1131, %v1131
      %v1140 = vcombine.high %v1138, %v1138
      %v1141 = vcombine.high %v1007, %v1007
      %v1143 = vunpack.c.l.s4 1983009808
      %v1144 = vunpack.c.0.s8 %v1143
      %v1145 = vlaneseq
      %v1146 = vshrl.u32 %v1145, 7
      %v1147 = vsub.s32 %v1144, %v1146
      %v1148 = vrot.slane %v1007, %v1147
      %v1150 = vunpack.c.l.s4 1983009808
      %v1151 = vunpack.c.0.s8 %v1150
      %v1152 = vlaneseq
      %v1153 = vshrl.u32 %v1152, 7
      %v1154 = vsub.s32 %v1151, %v1153
      %v1155 = vrot.slane %v1141, %v1154
      %v1156 = vcombine.high %v1148, %v1148
      %v1157 = vcombine.high %v1008, %v1008
      %v1159 = vunpack.c.l.s4 1983009808
      %v1160 = vunpack.c.0.s8 %v1159
      %v1161 = vlaneseq
      %v1162 = vshrl.u32 %v1161, 7
      %v1163 = vsub.s32 %v1160, %v1162
      %v1164 = vrot.slane %v1008, %v1163
      %v1166 = vunpack.c.l.s4 1983009808
      %v1167 = vunpack.c.0.s8 %v1166
      %v1168 = vlaneseq
      %v1169 = vshrl.u32 %v1168, 7
      %v1170 = vsub.s32 %v1167, %v1169
      %v1171 = vrot.slane %v1157, %v1170
      %v1172 = vcombine.high %v1164, %v1164
      %v1173 = vcombine.high %v1171, %v1171
      %v1174 = vcombine.high %v1009, %v1009
      %v1176 = vunpack.c.l.s4 1983009808
      %v1177 = vunpack.c.0.s8 %v1176
      %v1178 = vlaneseq
      %v1179 = vshrl.u32 %v1178, 7
      %v1180 = vsub.s32 %v1177, %v1179
      %v1181 = vrot.slane %v1009, %v1180
      %v1183 = vunpack.c.l.s4 1983009808
      %v1184 = vunpack.c.0.s8 %v1183
      %v1185 = vlaneseq
      %v1186 = vshrl.u32 %v1185, 7
      %v1187 = vsub.s32 %v1184, %v1186
      %v1188 = vrot.slane %v1174, %v1187
      %v1189 = vcombine.high %v1181, %v1181
      %v1190 = vcombine.high %v1010, %v1010
      %v1192 = vunpack.c.l.s4 1983009808
      %v1193 = vunpack.c.0.s8 %v1192
      %v1194 = vlaneseq
      %v1195 = vshrl.u32 %v1194, 7
      %v1196 = vsub.s32 %v1193, %v1195
      %v1197 = vrot.slane %v1010, %v1196
      %v1199 = vunpack.c.l.s4 1983009808
      %v1200 = vunpack.c.0.s8 %v1199
      %v1201 = vlaneseq
      %v1202 = vshrl.u32 %v1201, 7
      %v1203 = vsub.s32 %v1200, %v1202
      %v1204 = vrot.slane %v1190, %v1203
      %v1205 = vcombine.high %v1197, %v1197
      %v1206 = vcombine.high %v1204, %v1204
      %v1207 = vcombine.high %v1011, %v1011
      %v1209 = vunpack.c.l.s4 1983009808
      %v1210 = vunpack.c.0.s8 %v1209
      %v1211 = vlaneseq
      %v1212 = vshrl.u32 %v1211, 7
      %v1213 = vsub.s32 %v1210, %v1212
      %v1214 = vrot.slane %v1011, %v1213
      %v1216 = vunpack.c.l.s4 1983009808
      %v1217 = vunpack.c.0.s8 %v1216
      %v1218 = vlaneseq
      %v1219 = vshrl.u32 %v1218, 7
      %v1220 = vsub.s32 %v1217, %v1219
      %v1221 = vrot.slane %v1207, %v1220
      %v1222 = vcombine.high %v1214, %v1214
      %v1223 = vcombine.high %v1012, %v1012
      %v1225 = vunpack.c.l.s4 1983009808
      %v1226 = vunpack.c.0.s8 %v1225
      %v1227 = vlaneseq
      %v1228 = vshrl.u32 %v1227, 7
      %v1229 = vsub.s32 %v1226, %v1228
      %v1230 = vrot.slane %v1012, %v1229
      %v1232 = vunpack.c.l.s4 1983009808
      %v1233 = vunpack.c.0.s8 %v1232
      %v1234 = vlaneseq
      %v1235 = vshrl.u32 %v1234, 7
      %v1236 = vsub.s32 %v1233, %v1235
      %v1237 = vrot.slane %v1223, %v1236
      %v1238 = vcombine.high %v1230, %v1230
      %v1239 = vcombine.high %v1237, %v1237
      %v1240 = vcombine.high %v1013, %v1013
      %v1242 = vunpack.c.l.s4 1983009808
      %v1243 = vunpack.c.0.s8 %v1242
      %v1244 = vlaneseq
      %v1245 = vshrl.u32 %v1244, 7
      %v1246 = vsub.s32 %v1243, %v1245
      %v1247 = vrot.slane %v1013, %v1246
      %v1249 = vunpack.c.l.s4 1983009808
      %v1250 = vunpack.c.0.s8 %v1249
      %v1251 = vlaneseq
      %v1252 = vshrl.u32 %v1251, 7
      %v1253 = vsub.s32 %v1250, %v1252
      %v1254 = vrot.slane %v1240, %v1253
      %v1255 = vcombine.high %v1247, %v1247
      %v1256 = vcombine.high %v1014, %v1014
      %v1258 = vunpack.c.l.s4 1983009808
      %v1259 = vunpack.c.0.s8 %v1258
      %v1260 = vlaneseq
      %v1261 = vshrl.u32 %v1260, 7
      %v1262 = vsub.s32 %v1259, %v1261
      %v1263 = vrot.slane %v1014, %v1262
      %v1265 = vunpack.c.l.s4 1983009808
      %v1266 = vunpack.c.0.s8 %v1265
      %v1267 = vlaneseq
      %v1268 = vshrl.u32 %v1267, 7
      %v1269 = vsub.s32 %v1266, %v1268
      %v1270 = vrot.slane %v1256, %v1269
      %v1271 = vcombine.high %v1263, %v1263
      %v1272 = vcombine.high %v1270, %v1270
      %v1273 = vcombine.high %v1015, %v1015
      %v1275 = vunpack.c.l.s4 1983009808
      %v1276 = vunpack.c.0.s8 %v1275
      %v1277 = vlaneseq
      %v1278 = vshrl.u32 %v1277, 7
      %v1279 = vsub.s32 %v1276, %v1278
      %v1280 = vrot.slane %v1015, %v1279
      %v1282 = vunpack.c.l.s4 1983009808
      %v1283 = vunpack.c.0.s8 %v1282
      %v1284 = vlaneseq
      %v1285 = vshrl.u32 %v1284, 7
      %v1286 = vsub.s32 %v1283, %v1285
      %v1287 = vrot.slane %v1273, %v1286
      %v1288 = vcombine.high %v1280, %v1280
      %v1289 = vcombine.high %v1016, %v1016
      %v1291 = vunpack.c.l.s4 1983009808
      %v1292 = vunpack.c.0.s8 %v1291
      %v1293 = vlaneseq
      %v1294 = vshrl.u32 %v1293, 7
      %v1295 = vsub.s32 %v1292, %v1294
      %v1296 = vrot.slane %v1016, %v1295
      %v1298 = vunpack.c.l.s4 1983009808
      %v1299 = vunpack.c.0.s8 %v1298
      %v1300 = vlaneseq
      %v1301 = vshrl.u32 %v1300, 7
      %v1302 = vsub.s32 %v1299, %v1301
      %v1303 = vrot.slane %v1289, %v1302
      %v1304 = vcombine.high %v1296, %v1296
      %v1305 = vcombine.high %v1303, %v1303
      %v1306 = vcombine.high %v1017, %v1017
      %v1308 = vunpack.c.l.s4 1983009808
      %v1309 = vunpack.c.0.s8 %v1308
      %v1310 = vlaneseq
      %v1311 = vshrl.u32 %v1310, 7
      %v1312 = vsub.s32 %v1309, %v1311
      %v1313 = vrot.slane %v1017, %v1312
      %v1315 = vunpack.c.l.s4 1983009808
      %v1316 = vunpack.c.0.s8 %v1315
      %v1317 = vlaneseq
      %v1318 = vshrl.u32 %v1317, 7
      %v1319 = vsub.s32 %v1316, %v1318
      %v1320 = vrot.slane %v1306, %v1319
      %v1321 = vcombine.high %v1313, %v1313
      %v1322 = vcombine.high %v1018, %v1018
      %v1324 = vunpack.c.l.s4 1983009808
      %v1325 = vunpack.c.0.s8 %v1324
      %v1326 = vlaneseq
      %v1327 = vshrl.u32 %v1326, 7
      %v1328 = vsub.s32 %v1325, %v1327
      %v1329 = vrot.slane %v1018, %v1328
      %v1331 = vunpack.c.l.s4 1983009808
      %v1332 = vunpack.c.0.s8 %v1331
      %v1333 = vlaneseq
      %v1334 = vshrl.u32 %v1333, 7
      %v1335 = vsub.s32 %v1332, %v1334
      %v1336 = vrot.slane %v1322, %v1335
      %v1337 = vcombine.high %v1329, %v1329
      %v1338 = vcombine.high %v1336, %v1336
      %v1339 = vcombine.high %v1019, %v1019
      %v1341 = vunpack.c.l.s4 1983009808
      %v1342 = vunpack.c.0.s8 %v1341
      %v1343 = vlaneseq
      %v1344 = vshrl.u32 %v1343, 7
      %v1345 = vsub.s32 %v1342, %v1344
      %v1346 = vrot.slane %v1019, %v1345
      %v1348 = vunpack.c.l.s4 1983009808
      %v1349 = vunpack.c.0.s8 %v1348
      %v1350 = vlaneseq
      %v1351 = vshrl.u32 %v1350, 7
      %v1352 = vsub.s32 %v1349, %v1351
      %v1353 = vrot.slane %v1339, %v1352
      %v1354 = vcombine.high %v1346, %v1346
      %v1355 = vcombine.high %v1020, %v1020
      %v1357 = vunpack.c.l.s4 1983009808
      %v1358 = vunpack.c.0.s8 %v1357
      %v1359 = vlaneseq
      %v1360 = vshrl.u32 %v1359, 7
      %v1361 = vsub.s32 %v1358, %v1360
      %v1362 = vrot.slane %v1020, %v1361
      %v1364 = vunpack.c.l.s4 1983009808
      %v1365 = vunpack.c.0.s8 %v1364
      %v1366 = vlaneseq
      %v1367 = vshrl.u32 %v1366, 7
      %v1368 = vsub.s32 %v1365, %v1367
      %v1369 = vrot.slane %v1355, %v1368
      %v1370 = vcombine.high %v1362, %v1362
      %v1371 = vcombine.high %v1369, %v1369
      %v1372 = vcombine.high %v1021, %v1021
      %v1374 = vunpack.c.l.s4 1983009808
      %v1375 = vunpack.c.0.s8 %v1374
      %v1376 = vlaneseq
      %v1377 = vshrl.u32 %v1376, 7
      %v1378 = vsub.s32 %v1375, %v1377
      %v1379 = vrot.slane %v1021, %v1378
      %v1381 = vunpack.c.l.s4 1983009808
      %v1382 = vunpack.c.0.s8 %v1381
      %v1383 = vlaneseq
      %v1384 = vshrl.u32 %v1383, 7
      %v1385 = vsub.s32 %v1382, %v1384
      %v1386 = vrot.slane %v1372, %v1385
      %v1387 = vcombine.high %v1379, %v1379
      %v1388 = vcombine.high %v1022, %v1022
      %v1390 = vunpack.c.l.s4 1983009808
      %v1391 = vunpack.c.0.s8 %v1390
      %v1392 = vlaneseq
      %v1393 = vshrl.u32 %v1392, 7
      %v1394 = vsub.s32 %v1391, %v1393
      %v1395 = vrot.slane %v1022, %v1394
      %v1397 = vunpack.c.l.s4 1983009808
      %v1398 = vunpack.c.0.s8 %v1397
      %v1399 = vlaneseq
      %v1400 = vshrl.u32 %v1399, 7
      %v1401 = vsub.s32 %v1398, %v1400
      %v1402 = vrot.slane %v1388, %v1401
      %v1403 = vcombine.high %v1395, %v1395
      %v1404 = vcombine.high %v1402, %v1402
      %v1405 = vcombine.high %v1023, %v1023
      %v1407 = vunpack.c.l.s4 1983009808
      %v1408 = vunpack.c.0.s8 %v1407
      %v1409 = vlaneseq
      %v1410 = vshrl.u32 %v1409, 7
      %v1411 = vsub.s32 %v1408, %v1410
      %v1412 = vrot.slane %v1023, %v1411
      %v1414 = vunpack.c.l.s4 1983009808
      %v1415 = vunpack.c.0.s8 %v1414
      %v1416 = vlaneseq
      %v1417 = vshrl.u32 %v1416, 7
      %v1418 = vsub.s32 %v1415, %v1417
      %v1419 = vrot.slane %v1405, %v1418
      %v1420 = vcombine.high %v1412, %v1412
      %v1421 = vcombine.high %v1024, %v1024
      %v1423 = vunpack.c.l.s4 1983009808
      %v1424 = vunpack.c.0.s8 %v1423
      %v1425 = vlaneseq
      %v1426 = vshrl.u32 %v1425, 7
      %v1427 = vsub.s32 %v1424, %v1426
      %v1428 = vrot.slane %v1024, %v1427
      %v1430 = vunpack.c.l.s4 1983009808
      %v1431 = vunpack.c.0.s8 %v1430
      %v1432 = vlaneseq
      %v1433 = vshrl.u32 %v1432, 7
      %v1434 = vsub.s32 %v1431, %v1433
      %v1435 = vrot.slane %v1421, %v1434
      %v1436 = vcombine.high %v1428, %v1428
      %v1437 = vcombine.high %v1435, %v1435
      %v1438 = vcombine.high %v1025, %v1025
      %v1440 = vunpack.c.l.s4 1983009808
      %v1441 = vunpack.c.0.s8 %v1440
      %v1442 = vlaneseq
      %v1443 = vshrl.u32 %v1442, 7
      %v1444 = vsub.s32 %v1441, %v1443
      %v1445 = vrot.slane %v1025, %v1444
      %v1447 = vunpack.c.l.s4 1983009808
      %v1448 = vunpack.c.0.s8 %v1447
      %v1449 = vlaneseq
      %v1450 = vshrl.u32 %v1449, 7
      %v1451 = vsub.s32 %v1448, %v1450
      %v1452 = vrot.slane %v1438, %v1451
      %v1453 = vcombine.high %v1445, %v1445
      %v1454 = vcombine.high %v1026, %v1026
      %v1456 = vunpack.c.l.s4 1983009808
      %v1457 = vunpack.c.0.s8 %v1456
      %v1458 = vlaneseq
      %v1459 = vshrl.u32 %v1458, 7
      %v1460 = vsub.s32 %v1457, %v1459
      %v1461 = vrot.slane %v1026, %v1460
      %v1463 = vunpack.c.l.s4 1983009808
      %v1464 = vunpack.c.0.s8 %v1463
      %v1465 = vlaneseq
      %v1466 = vshrl.u32 %v1465, 7
      %v1467 = vsub.s32 %v1464, %v1466
      %v1468 = vrot.slane %v1454, %v1467
      %v1469 = vcombine.high %v1461, %v1461
      %v1470 = vcombine.high %v1468, %v1468
      %v1471 = vcombine.high %v1027, %v1027
      %v1473 = vunpack.c.l.s4 1983009808
      %v1474 = vunpack.c.0.s8 %v1473
      %v1475 = vlaneseq
      %v1476 = vshrl.u32 %v1475, 7
      %v1477 = vsub.s32 %v1474, %v1476
      %v1478 = vrot.slane %v1027, %v1477
      %v1480 = vunpack.c.l.s4 1983009808
      %v1481 = vunpack.c.0.s8 %v1480
      %v1482 = vlaneseq
      %v1483 = vshrl.u32 %v1482, 7
      %v1484 = vsub.s32 %v1481, %v1483
      %v1485 = vrot.slane %v1471, %v1484
      %v1486 = vcombine.high %v1478, %v1478
      %v1487 = vcombine.high %v1028, %v1028
      %v1489 = vunpack.c.l.s4 1983009808
      %v1490 = vunpack.c.0.s8 %v1489
      %v1491 = vlaneseq
      %v1492 = vshrl.u32 %v1491, 7
      %v1493 = vsub.s32 %v1490, %v1492
      %v1494 = vrot.slane %v1028, %v1493
      %v1496 = vunpack.c.l.s4 1983009808
      %v1497 = vunpack.c.0.s8 %v1496
      %v1498 = vlaneseq
      %v1499 = vshrl.u32 %v1498, 7
      %v1500 = vsub.s32 %v1497, %v1499
      %v1501 = vrot.slane %v1487, %v1500
      %v1502 = vcombine.high %v1494, %v1494
      %v1503 = vcombine.high %v1501, %v1501
      %v1504 = vcombine.high %v1029, %v1029
      %v1506 = vunpack.c.l.s4 1983009808
      %v1507 = vunpack.c.0.s8 %v1506
      %v1508 = vlaneseq
      %v1509 = vshrl.u32 %v1508, 7
      %v1510 = vsub.s32 %v1507, %v1509
      %v1511 = vrot.slane %v1029, %v1510
      %v1513 = vunpack.c.l.s4 1983009808
      %v1514 = vunpack.c.0.s8 %v1513
      %v1515 = vlaneseq
      %v1516 = vshrl.u32 %v1515, 7
      %v1517 = vsub.s32 %v1514, %v1516
      %v1518 = vrot.slane %v1504, %v1517
      %v1519 = vcombine.high %v1511, %v1511
      %v1520 = vcombine.low %v1065, %v1073
      %v1521 = vcombine.low %v1072, %v1074
      %v1523 = vunpack.c.l.s4 1983009808
      %v1524 = vunpack.c.0.s8 %v1523
      %v1525 = vlaneseq
      %v1526 = vshrl.u32 %v1525, 7
      %v1527 = vsub.s32 %v1524, %v1526
      %v1528 = vrot.slane %v1520, %v1527
      %v1530 = vunpack.c.l.s4 1983009808
      %v1531 = vunpack.c.0.s8 %v1530
      %v1532 = vlaneseq
      %v1533 = vshrl.u32 %v1532, 7
      %v1534 = vsub.s32 %v1531, %v1533
      %v1535 = vrot.slane %v1521, %v1534
      %v1536 = vcombine.low %v1528, %v1535
      %v1537 = vcombine.low %v1082, %v1090
      %v1538 = vcombine.low %v1089, %v1098
      %v1540 = vunpack.c.l.s4 1983009808
      %v1541 = vunpack.c.0.s8 %v1540
      %v1542 = vlaneseq
      %v1543 = vshrl.u32 %v1542, 7
      %v1544 = vsub.s32 %v1541, %v1543
      %v1545 = vrot.slane %v1537, %v1544
      %v1547 = vunpack.c.l.s4 1983009808
      %v1548 = vunpack.c.0.s8 %v1547
      %v1549 = vlaneseq
      %v1550 = vshrl.u32 %v1549, 7
      %v1551 = vsub.s32 %v1548, %v1550
      %v1552 = vrot.slane %v1538, %v1551
      %v1553 = vcombine.low %v1545, %v1552
      %v1554 = vcombine.low %v1106, %v1105
      %v1555 = vcombine.low %v1107, %v1115
      %v1557 = vunpack.c.l.s4 1983009808
      %v1558 = vunpack.c.0.s8 %v1557
      %v1559 = vlaneseq
      %v1560 = vshrl.u32 %v1559, 7
      %v1561 = vsub.s32 %v1558, %v1560
      %v1562 = vrot.slane %v1554, %v1561
      %v1564 = vunpack.c.l.s4 1983009808
      %v1565 = vunpack.c.0.s8 %v1564
      %v1566 = vlaneseq
      %v1567 = vshrl.u32 %v1566, 7
      %v1568 = vsub.s32 %v1565, %v1567
      %v1569 = vrot.slane %v1555, %v1568
      %v1570 = vcombine.low %v1562, %v1569
      %v1571 = vcombine.low %v1123, %v1122
      %v1572 = vcombine.low %v1131, %v1139
      %v1574 = vunpack.c.l.s4 1983009808
      %v1575 = vunpack.c.0.s8 %v1574
      %v1576 = vlaneseq
      %v1577 = vshrl.u32 %v1576, 7
      %v1578 = vsub.s32 %v1575, %v1577
      %v1579 = vrot.slane %v1571, %v1578
      %v1581 = vunpack.c.l.s4 1983009808
      %v1582 = vunpack.c.0.s8 %v1581
      %v1583 = vlaneseq
      %v1584 = vshrl.u32 %v1583, 7
      %v1585 = vsub.s32 %v1582, %v1584
      %v1586 = vrot.slane %v1572, %v1585
      %v1587 = vcombine.low %v1579, %v1586
      %v1588 = vcombine.low %v1138, %v1140
      %v1589 = vcombine.low %v1148, %v1156
      %v1591 = vunpack.c.l.s4 1983009808
      %v1592 = vunpack.c.0.s8 %v1591
      %v1593 = vlaneseq
      %v1594 = vshrl.u32 %v1593, 7
      %v1595 = vsub.s32 %v1592, %v1594
      %v1596 = vrot.slane %v1588, %v1595
      %v1598 = vunpack.c.l.s4 1983009808
      %v1599 = vunpack.c.0.s8 %v1598
      %v1600 = vlaneseq
      %v1601 = vshrl.u32 %v1600, 7
      %v1602 = vsub.s32 %v1599, %v1601
      %v1603 = vrot.slane %v1589, %v1602
      %v1604 = vcombine.low %v1596, %v1603
      %v1605 = vcombine.low %v1155, %v1164
      %v1606 = vcombine.low %v1172, %v1171
      %v1608 = vunpack.c.l.s4 1983009808
      %v1609 = vunpack.c.0.s8 %v1608
      %v1610 = vlaneseq
      %v1611 = vshrl.u32 %v1610, 7
      %v1612 = vsub.s32 %v1609, %v1611
      %v1613 = vrot.slane %v1605, %v1612
      %v1615 = vunpack.c.l.s4 1983009808
      %v1616 = vunpack.c.0.s8 %v1615
      %v1617 = vlaneseq
      %v1618 = vshrl.u32 %v1617, 7
      %v1619 = vsub.s32 %v1616, %v1618
      %v1620 = vrot.slane %v1606, %v1619
      %v1621 = vcombine.low %v1613, %v1620
      %v1622 = vcombine.low %v1173, %v1181
      %v1623 = vcombine.low %v1189, %v1188
      %v1625 = vunpack.c.l.s4 1983009808
      %v1626 = vunpack.c.0.s8 %v1625
      %v1627 = vlaneseq
      %v1628 = vshrl.u32 %v1627, 7
      %v1629 = vsub.s32 %v1626, %v1628
      %v1630 = vrot.slane %v1622, %v1629
      %v1632 = vunpack.c.l.s4 1983009808
      %v1633 = vunpack.c.0.s8 %v1632
      %v1634 = vlaneseq
      %v1635 = vshrl.u32 %v1634, 7
      %v1636 = vsub.s32 %v1633, %v1635
      %v1637 = vrot.slane %v1623, %v1636
      %v1638 = vcombine.low %v1630, %v1637
      %v1639 = vcombine.low %v1197, %v1205
      %v1640 = vcombine.low %v1204, %v1206
      %v1642 = vunpack.c.l.s4 1983009808
      %v1643 = vunpack.c.0.s8 %v1642
      %v1644 = vlaneseq
      %v1645 = vshrl.u32 %v1644, 7
      %v1646 = vsub.s32 %v1643, %v1645
      %v1647 = vrot.slane %v1639, %v1646
      %v1649 = vunpack.c.l.s4 1983009808
      %v1650 = vunpack.c.0.s8 %v1649
      %v1651 = vlaneseq
      %v1652 = vshrl.u32 %v1651, 7
      %v1653 = vsub.s32 %v1650, %v1652
      %v1654 = vrot.slane %v1640, %v1653
      %v1655 = vcombine.low %v1647, %v1654
      %v1656 = vcombine.low %v1214, %v1222
      %v1657 = vcombine.low %v1221, %v1230
      %v1659 = vunpack.c.l.s4 1983009808
      %v1660 = vunpack.c.0.s8 %v1659
      %v1661 = vlaneseq
      %v1662 = vshrl.u32 %v1661, 7
      %v1663 = vsub.s32 %v1660, %v1662
      %v1664 = vrot.slane %v1656, %v1663
      %v1666 = vunpack.c.l.s4 1983009808
      %v1667 = vunpack.c.0.s8 %v1666
      %v1668 = vlaneseq
      %v1669 = vshrl.u32 %v1668, 7
      %v1670 = vsub.s32 %v1667, %v1669
      %v1671 = vrot.slane %v1657, %v1670
      %v1672 = vcombine.low %v1664, %v1671
      %v1673 = vcombine.low %v1238, %v1237
      %v1674 = vcombine.low %v1239, %v1247
      %v1676 = vunpack.c.l.s4 1983009808
      %v1677 = vunpack.c.0.s8 %v1676
      %v1678 = vlaneseq
      %v1679 = vshrl.u32 %v1678, 7
      %v1680 = vsub.s32 %v1677, %v1679
      %v1681 = vrot.slane %v1673, %v1680
      %v1683 = vunpack.c.l.s4 1983009808
      %v1684 = vunpack.c.0.s8 %v1683
      %v1685 = vlaneseq
      %v1686 = vshrl.u32 %v1685, 7
      %v1687 = vsub.s32 %v1684, %v1686
      %v1688 = vrot.slane %v1674, %v1687
      %v1689 = vcombine.low %v1681, %v1688
      %v1690 = vcombine.low %v1255, %v1254
      %v1691 = vcombine.low %v1263, %v1271
      %v1693 = vunpack.c.l.s4 1983009808
      %v1694 = vunpack.c.0.s8 %v1693
      %v1695 = vlaneseq
      %v1696 = vshrl.u32 %v1695, 7
      %v1697 = vsub.s32 %v1694, %v1696
      %v1698 = vrot.slane %v1690, %v1697
      %v1700 = vunpack.c.l.s4 1983009808
      %v1701 = vunpack.c.0.s8 %v1700
      %v1702 = vlaneseq
      %v1703 = vshrl.u32 %v1702, 7
      %v1704 = vsub.s32 %v1701, %v1703
      %v1705 = vrot.slane %v1691, %v1704
      %v1706 = vcombine.low %v1698, %v1705
      %v1707 = vcombine.low %v1270, %v1272
      %v1708 = vcombine.low %v1280, %v1288
      %v1710 = vunpack.c.l.s4 1983009808
      %v1711 = vunpack.c.0.s8 %v1710
      %v1712 = vlaneseq
      %v1713 = vshrl.u32 %v1712, 7
      %v1714 = vsub.s32 %v1711, %v1713
      %v1715 = vrot.slane %v1707, %v1714
      %v1717 = vunpack.c.l.s4 1983009808
      %v1718 = vunpack.c.0.s8 %v1717
      %v1719 = vlaneseq
      %v1720 = vshrl.u32 %v1719, 7
      %v1721 = vsub.s32 %v1718, %v1720
      %v1722 = vrot.slane %v1708, %v1721
      %v1723 = vcombine.low %v1715, %v1722
      %v1724 = vcombine.low %v1287, %v1296
      %v1725 = vcombine.low %v1304, %v1303
      %v1727 = vunpack.c.l.s4 1983009808
      %v1728 = vunpack.c.0.s8 %v1727
      %v1729 = vlaneseq
      %v1730 = vshrl.u32 %v1729, 7
      %v1731 = vsub.s32 %v1728, %v1730
      %v1732 = vrot.slane %v1724, %v1731
      %v1734 = vunpack.c.l.s4 1983009808
      %v1735 = vunpack.c.0.s8 %v1734
      %v1736 = vlaneseq
      %v1737 = vshrl.u32 %v1736, 7
      %v1738 = vsub.s32 %v1735, %v1737
      %v1739 = vrot.slane %v1725, %v1738
      %v1740 = vcombine.low %v1732, %v1739
      %v1741 = vcombine.low %v1305, %v1313
      %v1742 = vcombine.low %v1321, %v1320
      %v1744 = vunpack.c.l.s4 1983009808
      %v1745 = vunpack.c.0.s8 %v1744
      %v1746 = vlaneseq
      %v1747 = vshrl.u32 %v1746, 7
      %v1748 = vsub.s32 %v1745, %v1747
      %v1749 = vrot.slane %v1741, %v1748
      %v1751 = vunpack.c.l.s4 1983009808
      %v1752 = vunpack.c.0.s8 %v1751
      %v1753 = vlaneseq
      %v1754 = vshrl.u32 %v1753, 7
      %v1755 = vsub.s32 %v1752, %v1754
      %v1756 = vrot.slane %v1742, %v1755
      %v1757 = vcombine.low %v1749, %v1756
      %v1758 = vcombine.low %v1329, %v1337
      %v1759 = vcombine.low %v1336, %v1338
      %v1761 = vunpack.c.l.s4 1983009808
      %v1762 = vunpack.c.0.s8 %v1761
      %v1763 = vlaneseq
      %v1764 = vshrl.u32 %v1763, 7
      %v1765 = vsub.s32 %v1762, %v1764
      %v1766 = vrot.slane %v1758, %v1765
      %v1768 = vunpack.c.l.s4 1983009808
      %v1769 = vunpack.c.0.s8 %v1768
      %v1770 = vlaneseq
      %v1771 = vshrl.u32 %v1770, 7
      %v1772 = vsub.s32 %v1769, %v1771
      %v1773 = vrot.slane %v1759, %v1772
      %v1774 = vcombine.low %v1766, %v1773
      %v1775 = vcombine.low %v1346, %v1354
      %v1776 = vcombine.low %v1353, %v1362
      %v1778 = vunpack.c.l.s4 1983009808
      %v1779 = vunpack.c.0.s8 %v1778
      %v1780 = vlaneseq
      %v1781 = vshrl.u32 %v1780, 7
      %v1782 = vsub.s32 %v1779, %v1781
      %v1783 = vrot.slane %v1775, %v1782
      %v1785 = vunpack.c.l.s4 1983009808
      %v1786 = vunpack.c.0.s8 %v1785
      %v1787 = vlaneseq
      %v1788 = vshrl.u32 %v1787, 7
      %v1789 = vsub.s32 %v1786, %v1788
      %v1790 = vrot.slane %v1776, %v1789
      %v1791 = vcombine.low %v1783, %v1790
      %v1792 = vcombine.low %v1370, %v1369
      %v1793 = vcombine.low %v1371, %v1379
      %v1795 = vunpack.c.l.s4 1983009808
      %v1796 = vunpack.c.0.s8 %v1795
      %v1797 = vlaneseq
      %v1798 = vshrl.u32 %v1797, 7
      %v1799 = vsub.s32 %v1796, %v1798
      %v1800 = vrot.slane %v1792, %v1799
      %v1802 = vunpack.c.l.s4 1983009808
      %v1803 = vunpack.c.0.s8 %v1802
      %v1804 = vlaneseq
      %v1805 = vshrl.u32 %v1804, 7
      %v1806 = vsub.s32 %v1803, %v1805
      %v1807 = vrot.slane %v1793, %v1806
      %v1808 = vcombine.low %v1800, %v1807
      %v1809 = vcombine.low %v1387, %v1386
      %v1810 = vcombine.low %v1395, %v1403
      %v1812 = vunpack.c.l.s4 1983009808
      %v1813 = vunpack.c.0.s8 %v1812
      %v1814 = vlaneseq
      %v1815 = vshrl.u32 %v1814, 7
      %v1816 = vsub.s32 %v1813, %v1815
      %v1817 = vrot.slane %v1809, %v1816
      %v1819 = vunpack.c.l.s4 1983009808
      %v1820 = vunpack.c.0.s8 %v1819
      %v1821 = vlaneseq
      %v1822 = vshrl.u32 %v1821, 7
      %v1823 = vsub.s32 %v1820, %v1822
      %v1824 = vrot.slane %v1810, %v1823
      %v1825 = vcombine.low %v1817, %v1824
      %v1826 = vcombine.low %v1402, %v1404
      %v1827 = vcombine.low %v1412, %v1420
      %v1829 = vunpack.c.l.s4 1983009808
      %v1830 = vunpack.c.0.s8 %v1829
      %v1831 = vlaneseq
      %v1832 = vshrl.u32 %v1831, 7
      %v1833 = vsub.s32 %v1830, %v1832
      %v1834 = vrot.slane %v1826, %v1833
      %v1836 = vunpack.c.l.s4 1983009808
      %v1837 = vunpack.c.0.s8 %v1836
      %v1838 = vlaneseq
      %v1839 = vshrl.u32 %v1838, 7
      %v1840 = vsub.s32 %v1837, %v1839
      %v1841 = vrot.slane %v1827, %v1840
      %v1842 = vcombine.low %v1834, %v1841
      %v1843 = vcombine.low %v1419, %v1428
      %v1844 = vcombine.low %v1436, %v1435
      %v1846 = vunpack.c.l.s4 1983009808
      %v1847 = vunpack.c.0.s8 %v1846
      %v1848 = vlaneseq
      %v1849 = vshrl.u32 %v1848, 7
      %v1850 = vsub.s32 %v1847, %v1849
      %v1851 = vrot.slane %v1843, %v1850
      %v1853 = vunpack.c.l.s4 1983009808
      %v1854 = vunpack.c.0.s8 %v1853
      %v1855 = vlaneseq
      %v1856 = vshrl.u32 %v1855, 7
      %v1857 = vsub.s32 %v1854, %v1856
      %v1858 = vrot.slane %v1844, %v1857
      %v1859 = vcombine.low %v1851, %v1858
      %v1860 = vcombine.low %v1437, %v1445
      %v1861 = vcombine.low %v1453, %v1452
      %v1863 = vunpack.c.l.s4 1983009808
      %v1864 = vunpack.c.0.s8 %v1863
      %v1865 = vlaneseq
      %v1866 = vshrl.u32 %v1865, 7
      %v1867 = vsub.s32 %v1864, %v1866
      %v1868 = vrot.slane %v1860, %v1867
      %v1870 = vunpack.c.l.s4 1983009808
      %v1871 = vunpack.c.0.s8 %v1870
      %v1872 = vlaneseq
      %v1873 = vshrl.u32 %v1872, 7
      %v1874 = vsub.s32 %v1871, %v1873
      %v1875 = vrot.slane %v1861, %v1874
      %v1876 = vcombine.low %v1868, %v1875
      %v1877 = vcombine.low %v1461, %v1469
      %v1878 = vcombine.low %v1468, %v1470
      %v1880 = vunpack.c.l.s4 1983009808
      %v1881 = vunpack.c.0.s8 %v1880
      %v1882 = vlaneseq
      %v1883 = vshrl.u32 %v1882, 7
      %v1884 = vsub.s32 %v1881, %v1883
      %v1885 = vrot.slane %v1877, %v1884
      %v1887 = vunpack.c.l.s4 1983009808
      %v1888 = vunpack.c.0.s8 %v1887
      %v1889 = vlaneseq
      %v1890 = vshrl.u32 %v1889, 7
      %v1891 = vsub.s32 %v1888, %v1890
      %v1892 = vrot.slane %v1878, %v1891
      %v1893 = vcombine.low %v1885, %v1892
      %v1894 = vcombine.low %v1478, %v1486
      %v1895 = vcombine.low %v1485, %v1494
      %v1897 = vunpack.c.l.s4 1983009808
      %v1898 = vunpack.c.0.s8 %v1897
      %v1899 = vlaneseq
      %v1900 = vshrl.u32 %v1899, 7
      %v1901 = vsub.s32 %v1898, %v1900
      %v1902 = vrot.slane %v1894, %v1901
      %v1904 = vunpack.c.l.s4 1983009808
      %v1905 = vunpack.c.0.s8 %v1904
      %v1906 = vlaneseq
      %v1907 = vshrl.u32 %v1906, 7
      %v1908 = vsub.s32 %v1905, %v1907
      %v1909 = vrot.slane %v1895, %v1908
      %v1910 = vcombine.low %v1902, %v1909
      %v1911 = vcombine.low %v1502, %v1501
      %v1912 = vcombine.low %v1503, %v1511
      %v1914 = vunpack.c.l.s4 1983009808
      %v1915 = vunpack.c.0.s8 %v1914
      %v1916 = vlaneseq
      %v1917 = vshrl.u32 %v1916, 7
      %v1918 = vsub.s32 %v1915, %v1917
      %v1919 = vrot.slane %v1911, %v1918
      %v1921 = vunpack.c.l.s4 1983009808
      %v1922 = vunpack.c.0.s8 %v1921
      %v1923 = vlaneseq
      %v1924 = vshrl.u32 %v1923, 7
      %v1925 = vsub.s32 %v1922, %v1924
      %v1926 = vrot.slane %v1912, %v1925
      %v1927 = vcombine.low %v1919, %v1926
      %v1928 = vcombine.low %v1519, %v1518
      %v1930 = vunpack.c.l.s4 1983009808
      %v1931 = vunpack.c.0.s8 %v1930
      %v1932 = vlaneseq
      %v1933 = vshrl.u32 %v1932, 7
      %v1934 = vsub.s32 %v1931, %v1933
      %v1935 = vrot.slane %v1928, %v1934
      %v1936 = vsel %vm972, %v1536, 0
      %v1938 = vsel %vm972, %v1553, 0
      %v1940 = vsel %vm972, %v1570, 0
      %v1942 = vsel %vm972, %v1587, 0
      %v1944 = vsel %vm972, %v1604, 0
      %v1946 = vsel %vm972, %v1621, 0
      %v1948 = vsel %vm972, %v1638, 0
      %v1950 = vsel %vm972, %v1655, 0
      %v1952 = vsel %vm972, %v1672, 0
      %v1954 = vsel %vm972, %v1689, 0
      %v1956 = vsel %vm972, %v1706, 0
      %v1958 = vsel %vm972, %v1723, 0
      %v1960 = vsel %vm972, %v1740, 0
      %v1962 = vsel %vm972, %v1757, 0
      %v1964 = vsel %vm972, %v1774, 0
      %v1966 = vsel %vm972, %v1791, 0
      %v1968 = vsel %vm972, %v1808, 0
      %v1970 = vsel %vm972, %v1825, 0
      %v1972 = vsel %vm972, %v1842, 0
      %v1974 = vsel %vm972, %v1859, 0
      %v1976 = vsel %vm972, %v1876, 0
      %v1978 = vsel %vm972, %v1893, 0
      %v1980 = vsel %vm972, %v1910, 0
      %v1982 = vsel %vm972, %v1927, 0
      %v1984 = vsel %vm972, %v1935, 0
      %vm1986 = vcmask 1043456
      %v1988 = vsel %vm1986, %v198, 0
      %1990 = vmatprep.subr.mxu0 0.0
      %1991 = vmatpush1.msra.mxu0 0.0
      %1992 = vmatprep.subr.mxu0 0.0
      %1993 = vmatpush1.msra.mxu0 0.0
      %1994 = vmatprep.subr.mxu0 0.0
      %1995 = vmatpush1.msra.mxu0 0.0
      %1996 = vmatprep.subr.mxu0 0.0
      %1997 = vmatpush1.msra.mxu0 0.0
      %1998 = vmatprep.subr.mxu0 0.0
      %1999 = vmatpush1.msra.mxu0 0.0
      %2000 = vmatprep.subr.mxu0 0.0
      %2001 = vmatpush1.msra.mxu0 0.0
      %2002 = vmatprep.subr.mxu0 0.0
      %2003 = vmatpush1.msra.mxu0 0.0
      %2004 = vmatprep.subr.mxu0 0.0
      %2005 = vmatpush1.msra.mxu0 0.0
      %2006 = vmatprep.subr.mxu0 0.0
      %2007 = vmatpush1.msra.mxu0 0.0
      %2008 = vmatprep.subr.mxu0 0.0
      %2009 = vmatpush1.msra.mxu0 0.0
      %2010 = vmatprep.subr.mxu0 0.0
      %2011 = vmatpush1.msra.mxu0 0.0
      %2012 = vmatprep.subr.mxu0 0.0
      %2013 = vmatpush1.msra.mxu0 0.0
      %2014 = vmatprep.subr.mxu0 0.0
      %2015 = vmatpush1.msra.mxu0 0.0
      %2016 = vmatprep.subr.mxu0 0.0
      %2017 = vmatpush1.msra.mxu0 0.0
      %2018 = vmatprep.subr.mxu0 0.0
      %2019 = vmatpush1.msra.mxu0 0.0
      %2020 = vmatprep.subr.mxu0 0.0
      %2021 = vmatpush1.msra.mxu0 %v1988
      %2022 = vmatprep.subr.mxu0 0.0
      %2023 = vmatpush2.msra.mxu0 0.0
      %2024 = vmatprep.subr.mxu0 0.0
      %2025 = vmatpush2.msra.mxu0 0.0
      %2026 = vmatprep.subr.mxu0 0.0
      %2027 = vmatpush2.msra.mxu0 0.0
      %2028 = vmatprep.subr.mxu0 0.0
      %2029 = vmatpush2.msra.mxu0 0.0
      %2030 = vmatprep.subr.mxu0 0.0
      %2031 = vmatpush2.msra.mxu0 0.0
      %2032 = vmatprep.subr.mxu0 0.0
      %2033 = vmatpush2.msra.mxu0 0.0
      %2034 = vmatprep.subr.mxu0 0.0
      %2035 = vmatpush2.msra.mxu0 0.0
      %2036 = vmatprep.subr.mxu0 0.0
      %2037 = vmatpush2.msra.mxu0 0.0
      %2038 = vmatprep.subr.mxu0 0.0
      %2039 = vmatpush2.msra.mxu0 0.0
      %2040 = vmatprep.subr.mxu0 0.0
      %2041 = vmatpush2.msra.mxu0 0.0
      %2042 = vmatprep.subr.mxu0 0.0
      %2043 = vmatpush2.msra.mxu0 0.0
      %2044 = vmatprep.subr.mxu0 0.0
      %2045 = vmatpush2.msra.mxu0 0.0
      %2046 = vmatprep.subr.mxu0 0.0
      %2047 = vmatpush2.msra.mxu0 0.0
      %2048 = vmatprep.subr.mxu0 0.0
      %2049 = vmatpush2.msra.mxu0 0.0
      %2050 = vmatprep.subr.mxu0 0.0
      %2051 = vmatpush2.msra.mxu0 0.0
      %2052 = vmatprep.subr.mxu0 0.0
      %2053 = vmatpush2.msra.mxu0 0.0
      %2054 = vmatprep.mubr.f32.mxu0 0.0
      %2055 = vmatmul.mubr.f32.gmra.mxu0 %v1936
      %v2056 = vpop.f32.mrf.mxu0
      %v2057 = vadd.f32 0.0, %v2056
      %v2058 = vpop.f32.mrf.mxu0
      %2059 = vmatprep.mubr.f32.mxu0 0.0
      %2060 = vmatmul.mubr.f32.gmra.mxu0 %v1938
      %v2061 = vpop.f32.mrf.mxu0
      %v2062 = vadd.f32 0.0, %v2061
      %v2063 = vpop.f32.mrf.mxu0
      %2064 = vmatprep.mubr.f32.mxu0 0.0
      %2065 = vmatmul.mubr.f32.gmra.mxu0 %v1940
      %v2066 = vpop.f32.mrf.mxu0
      %v2067 = vadd.f32 0.0, %v2066
      %v2068 = vpop.f32.mrf.mxu0
      %2069 = vmatprep.mubr.f32.mxu0 0.0
      %2070 = vmatmul.mubr.f32.gmra.mxu0 %v1942
      %v2071 = vpop.f32.mrf.mxu0
      %v2072 = vadd.f32 0.0, %v2071
      %v2073 = vpop.f32.mrf.mxu0
      %2074 = vmatprep.mubr.f32.mxu0 0.0
      %2075 = vmatmul.mubr.f32.gmra.mxu0 %v1944
      %v2076 = vpop.f32.mrf.mxu0
      %v2077 = vadd.f32 0.0, %v2076
      %v2078 = vpop.f32.mrf.mxu0
      %2079 = vmatprep.mubr.f32.mxu0 0.0
      %2080 = vmatmul.mubr.f32.gmra.mxu0 %v1946
      %v2081 = vpop.f32.mrf.mxu0
      %v2082 = vadd.f32 0.0, %v2081
      %v2083 = vpop.f32.mrf.mxu0
      %2084 = vmatprep.mubr.f32.mxu0 0.0
      %2085 = vmatmul.mubr.f32.gmra.mxu0 %v1948
      %v2086 = vpop.f32.mrf.mxu0
      %v2087 = vadd.f32 0.0, %v2086
      %v2088 = vpop.f32.mrf.mxu0
      %2089 = vmatprep.mubr.f32.mxu0 0.0
      %2090 = vmatmul.mubr.f32.gmra.mxu0 %v1950
      %v2091 = vpop.f32.mrf.mxu0
      %v2092 = vadd.f32 0.0, %v2091
      %v2093 = vpop.f32.mrf.mxu0
      %2094 = vmatprep.mubr.f32.mxu0 0.0
      %2095 = vmatmul.mubr.f32.gmra.mxu0 %v1952
      %v2096 = vpop.f32.mrf.mxu0
      %v2097 = vadd.f32 0.0, %v2096
      %v2098 = vpop.f32.mrf.mxu0
      %2099 = vmatprep.mubr.f32.mxu0 0.0
      %2100 = vmatmul.mubr.f32.gmra.mxu0 %v1954
      %v2101 = vpop.f32.mrf.mxu0
      %v2102 = vadd.f32 0.0, %v2101
      %v2103 = vpop.f32.mrf.mxu0
      %2104 = vmatprep.mubr.f32.mxu0 0.0
      %2105 = vmatmul.mubr.f32.gmra.mxu0 %v1956
      %v2106 = vpop.f32.mrf.mxu0
      %v2107 = vadd.f32 0.0, %v2106
      %v2108 = vpop.f32.mrf.mxu0
      %2109 = vmatprep.mubr.f32.mxu0 0.0
      %2110 = vmatmul.mubr.f32.gmra.mxu0 %v1958
      %v2111 = vpop.f32.mrf.mxu0
      %v2112 = vadd.f32 0.0, %v2111
      %v2113 = vpop.f32.mrf.mxu0
      %2114 = vmatprep.mubr.f32.mxu0 0.0
      %2115 = vmatmul.mubr.f32.gmra.mxu0 %v1960
      %v2116 = vpop.f32.mrf.mxu0
      %v2117 = vadd.f32 0.0, %v2116
      %v2118 = vpop.f32.mrf.mxu0
      %2119 = vmatprep.mubr.f32.mxu0 0.0
      %2120 = vmatmul.mubr.f32.gmra.mxu0 %v1962
      %v2121 = vpop.f32.mrf.mxu0
      %v2122 = vadd.f32 0.0, %v2121
      %v2123 = vpop.f32.mrf.mxu0
      %2124 = vmatprep.mubr.f32.mxu0 0.0
      %2125 = vmatmul.mubr.f32.gmra.mxu0 %v1964
      %v2126 = vpop.f32.mrf.mxu0
      %v2127 = vadd.f32 0.0, %v2126
      %v2128 = vpop.f32.mrf.mxu0
      %2129 = vmatprep.mubr.f32.mxu0 0.0
      %2130 = vmatmul.mubr.f32.gmra.mxu0 %v1966
      %v2131 = vpop.f32.mrf.mxu0
      %v2132 = vadd.f32 0.0, %v2131
      %v2133 = vpop.f32.mrf.mxu0
      %2134 = vmatprep.mubr.f32.mxu0 0.0
      %2135 = vmatmul.mubr.f32.gmra.mxu0 %v1968
      %v2136 = vpop.f32.mrf.mxu0
      %v2137 = vadd.f32 0.0, %v2136
      %v2138 = vpop.f32.mrf.mxu0
      %2139 = vmatprep.mubr.f32.mxu0 0.0
      %2140 = vmatmul.mubr.f32.gmra.mxu0 %v1970
      %v2141 = vpop.f32.mrf.mxu0
      %v2142 = vadd.f32 0.0, %v2141
      %v2143 = vpop.f32.mrf.mxu0
      %2144 = vmatprep.mubr.f32.mxu0 0.0
      %2145 = vmatmul.mubr.f32.gmra.mxu0 %v1972
      %v2146 = vpop.f32.mrf.mxu0
      %v2147 = vadd.f32 0.0, %v2146
      %v2148 = vpop.f32.mrf.mxu0
      %2149 = vmatprep.mubr.f32.mxu0 0.0
      %2150 = vmatmul.mubr.f32.gmra.mxu0 %v1974
      %v2151 = vpop.f32.mrf.mxu0
      %v2152 = vadd.f32 0.0, %v2151
      %v2153 = vpop.f32.mrf.mxu0
      %2154 = vmatprep.mubr.f32.mxu0 0.0
      %2155 = vmatmul.mubr.f32.gmra.mxu0 %v1976
      %v2156 = vpop.f32.mrf.mxu0
      %v2157 = vadd.f32 0.0, %v2156
      %v2158 = vpop.f32.mrf.mxu0
      %2159 = vmatprep.mubr.f32.mxu0 0.0
      %2160 = vmatmul.mubr.f32.gmra.mxu0 %v1978
      %v2161 = vpop.f32.mrf.mxu0
      %v2162 = vadd.f32 0.0, %v2161
      %v2163 = vpop.f32.mrf.mxu0
      %2164 = vmatprep.mubr.f32.mxu0 0.0
      %2165 = vmatmul.mubr.f32.gmra.mxu0 %v1980
      %v2166 = vpop.f32.mrf.mxu0
      %v2167 = vadd.f32 0.0, %v2166
      %v2168 = vpop.f32.mrf.mxu0
      %2169 = vmatprep.mubr.f32.mxu0 0.0
      %2170 = vmatmul.mubr.f32.gmra.mxu0 %v1982
      %v2171 = vpop.f32.mrf.mxu0
      %v2172 = vadd.f32 0.0, %v2171
      %v2173 = vpop.f32.mrf.mxu0
      %2174 = vmatprep.mubr.f32.mxu0 0.0
      %2175 = vmatmul.mubr.f32.gmra.mxu0 %v1984
      %v2176 = vpop.f32.mrf.mxu0
      %v2177 = vadd.f32 0.0, %v2176
      %v2178 = vpop.f32.mrf.mxu0
      %2179 = vdwg.mxu0
      %v2205 = vcombine.high %v2057, %v2057
      %v2207 = vunpack.c.l.s4 1983009808
      %v2208 = vunpack.c.0.s8 %v2207
      %v2209 = vlaneseq
      %v2210 = vshrl.u32 %v2209, 7
      %v2211 = vsub.s32 %v2208, %v2210
      %v2212 = vrot.slane %v2057, %v2211
      %v2214 = vunpack.c.l.s4 1983009808
      %v2215 = vunpack.c.0.s8 %v2214
      %v2216 = vlaneseq
      %v2217 = vshrl.u32 %v2216, 7
      %v2218 = vsub.s32 %v2215, %v2217
      %v2219 = vrot.slane %v2205, %v2218
      %v2220 = vcombine.high %v2212, %v2212
      %v2221 = vcombine.high %v2219, %v2219
      %v2222 = vcombine.high %v2062, %v2062
      %v2224 = vunpack.c.l.s4 1983009808
      %v2225 = vunpack.c.0.s8 %v2224
      %v2226 = vlaneseq
      %v2227 = vshrl.u32 %v2226, 7
      %v2228 = vsub.s32 %v2225, %v2227
      %v2229 = vrot.slane %v2062, %v2228
      %v2231 = vunpack.c.l.s4 1983009808
      %v2232 = vunpack.c.0.s8 %v2231
      %v2233 = vlaneseq
      %v2234 = vshrl.u32 %v2233, 7
      %v2235 = vsub.s32 %v2232, %v2234
      %v2236 = vrot.slane %v2222, %v2235
      %v2237 = vcombine.high %v2229, %v2229
      %v2238 = vcombine.high %v2236, %v2236
      %v2239 = vcombine.high %v2067, %v2067
      %v2241 = vunpack.c.l.s4 1983009808
      %v2242 = vunpack.c.0.s8 %v2241
      %v2243 = vlaneseq
      %v2244 = vshrl.u32 %v2243, 7
      %v2245 = vsub.s32 %v2242, %v2244
      %v2246 = vrot.slane %v2067, %v2245
      %v2248 = vunpack.c.l.s4 1983009808
      %v2249 = vunpack.c.0.s8 %v2248
      %v2250 = vlaneseq
      %v2251 = vshrl.u32 %v2250, 7
      %v2252 = vsub.s32 %v2249, %v2251
      %v2253 = vrot.slane %v2239, %v2252
      %v2254 = vcombine.high %v2246, %v2246
      %v2255 = vcombine.high %v2253, %v2253
      %v2256 = vcombine.high %v2072, %v2072
      %v2258 = vunpack.c.l.s4 1983009808
      %v2259 = vunpack.c.0.s8 %v2258
      %v2260 = vlaneseq
      %v2261 = vshrl.u32 %v2260, 7
      %v2262 = vsub.s32 %v2259, %v2261
      %v2263 = vrot.slane %v2072, %v2262
      %v2265 = vunpack.c.l.s4 1983009808
      %v2266 = vunpack.c.0.s8 %v2265
      %v2267 = vlaneseq
      %v2268 = vshrl.u32 %v2267, 7
      %v2269 = vsub.s32 %v2266, %v2268
      %v2270 = vrot.slane %v2256, %v2269
      %v2271 = vcombine.high %v2263, %v2263
      %v2272 = vcombine.high %v2270, %v2270
      %v2273 = vcombine.high %v2077, %v2077
      %v2275 = vunpack.c.l.s4 1983009808
      %v2276 = vunpack.c.0.s8 %v2275
      %v2277 = vlaneseq
      %v2278 = vshrl.u32 %v2277, 7
      %v2279 = vsub.s32 %v2276, %v2278
      %v2280 = vrot.slane %v2077, %v2279
      %v2282 = vunpack.c.l.s4 1983009808
      %v2283 = vunpack.c.0.s8 %v2282
      %v2284 = vlaneseq
      %v2285 = vshrl.u32 %v2284, 7
      %v2286 = vsub.s32 %v2283, %v2285
      %v2287 = vrot.slane %v2273, %v2286
      %v2288 = vcombine.high %v2280, %v2280
      %v2289 = vcombine.high %v2287, %v2287
      %v2290 = vcombine.high %v2082, %v2082
      %v2292 = vunpack.c.l.s4 1983009808
      %v2293 = vunpack.c.0.s8 %v2292
      %v2294 = vlaneseq
      %v2295 = vshrl.u32 %v2294, 7
      %v2296 = vsub.s32 %v2293, %v2295
      %v2297 = vrot.slane %v2082, %v2296
      %v2299 = vunpack.c.l.s4 1983009808
      %v2300 = vunpack.c.0.s8 %v2299
      %v2301 = vlaneseq
      %v2302 = vshrl.u32 %v2301, 7
      %v2303 = vsub.s32 %v2300, %v2302
      %v2304 = vrot.slane %v2290, %v2303
      %v2305 = vcombine.high %v2297, %v2297
      %v2306 = vcombine.high %v2304, %v2304
      %v2307 = vcombine.high %v2087, %v2087
      %v2309 = vunpack.c.l.s4 1983009808
      %v2310 = vunpack.c.0.s8 %v2309
      %v2311 = vlaneseq
      %v2312 = vshrl.u32 %v2311, 7
      %v2313 = vsub.s32 %v2310, %v2312
      %v2314 = vrot.slane %v2087, %v2313
      %v2316 = vunpack.c.l.s4 1983009808
      %v2317 = vunpack.c.0.s8 %v2316
      %v2318 = vlaneseq
      %v2319 = vshrl.u32 %v2318, 7
      %v2320 = vsub.s32 %v2317, %v2319
      %v2321 = vrot.slane %v2307, %v2320
      %v2322 = vcombine.high %v2314, %v2314
      %v2323 = vcombine.high %v2321, %v2321
      %v2324 = vcombine.high %v2092, %v2092
      %v2326 = vunpack.c.l.s4 1983009808
      %v2327 = vunpack.c.0.s8 %v2326
      %v2328 = vlaneseq
      %v2329 = vshrl.u32 %v2328, 7
      %v2330 = vsub.s32 %v2327, %v2329
      %v2331 = vrot.slane %v2092, %v2330
      %v2333 = vunpack.c.l.s4 1983009808
      %v2334 = vunpack.c.0.s8 %v2333
      %v2335 = vlaneseq
      %v2336 = vshrl.u32 %v2335, 7
      %v2337 = vsub.s32 %v2334, %v2336
      %v2338 = vrot.slane %v2324, %v2337
      %v2339 = vcombine.high %v2331, %v2331
      %v2340 = vcombine.high %v2338, %v2338
      %v2341 = vcombine.high %v2097, %v2097
      %v2343 = vunpack.c.l.s4 1983009808
      %v2344 = vunpack.c.0.s8 %v2343
      %v2345 = vlaneseq
      %v2346 = vshrl.u32 %v2345, 7
      %v2347 = vsub.s32 %v2344, %v2346
      %v2348 = vrot.slane %v2097, %v2347
      %v2350 = vunpack.c.l.s4 1983009808
      %v2351 = vunpack.c.0.s8 %v2350
      %v2352 = vlaneseq
      %v2353 = vshrl.u32 %v2352, 7
      %v2354 = vsub.s32 %v2351, %v2353
      %v2355 = vrot.slane %v2341, %v2354
      %v2356 = vcombine.high %v2348, %v2348
      %v2357 = vcombine.high %v2355, %v2355
      %v2358 = vcombine.high %v2102, %v2102
      %v2360 = vunpack.c.l.s4 1983009808
      %v2361 = vunpack.c.0.s8 %v2360
      %v2362 = vlaneseq
      %v2363 = vshrl.u32 %v2362, 7
      %v2364 = vsub.s32 %v2361, %v2363
      %v2365 = vrot.slane %v2102, %v2364
      %v2367 = vunpack.c.l.s4 1983009808
      %v2368 = vunpack.c.0.s8 %v2367
      %v2369 = vlaneseq
      %v2370 = vshrl.u32 %v2369, 7
      %v2371 = vsub.s32 %v2368, %v2370
      %v2372 = vrot.slane %v2358, %v2371
      %v2373 = vcombine.high %v2365, %v2365
      %v2374 = vcombine.high %v2372, %v2372
      %v2375 = vcombine.high %v2107, %v2107
      %v2377 = vunpack.c.l.s4 1983009808
      %v2378 = vunpack.c.0.s8 %v2377
      %v2379 = vlaneseq
      %v2380 = vshrl.u32 %v2379, 7
      %v2381 = vsub.s32 %v2378, %v2380
      %v2382 = vrot.slane %v2107, %v2381
      %v2384 = vunpack.c.l.s4 1983009808
      %v2385 = vunpack.c.0.s8 %v2384
      %v2386 = vlaneseq
      %v2387 = vshrl.u32 %v2386, 7
      %v2388 = vsub.s32 %v2385, %v2387
      %v2389 = vrot.slane %v2375, %v2388
      %v2390 = vcombine.high %v2382, %v2382
      %v2391 = vcombine.high %v2389, %v2389
      %v2392 = vcombine.high %v2112, %v2112
      %v2394 = vunpack.c.l.s4 1983009808
      %v2395 = vunpack.c.0.s8 %v2394
      %v2396 = vlaneseq
      %v2397 = vshrl.u32 %v2396, 7
      %v2398 = vsub.s32 %v2395, %v2397
      %v2399 = vrot.slane %v2112, %v2398
      %v2401 = vunpack.c.l.s4 1983009808
      %v2402 = vunpack.c.0.s8 %v2401
      %v2403 = vlaneseq
      %v2404 = vshrl.u32 %v2403, 7
      %v2405 = vsub.s32 %v2402, %v2404
      %v2406 = vrot.slane %v2392, %v2405
      %v2407 = vcombine.high %v2399, %v2399
      %v2408 = vcombine.high %v2406, %v2406
      %v2409 = vcombine.high %v2117, %v2117
      %v2411 = vunpack.c.l.s4 1983009808
      %v2412 = vunpack.c.0.s8 %v2411
      %v2413 = vlaneseq
      %v2414 = vshrl.u32 %v2413, 7
      %v2415 = vsub.s32 %v2412, %v2414
      %v2416 = vrot.slane %v2117, %v2415
      %v2418 = vunpack.c.l.s4 1983009808
      %v2419 = vunpack.c.0.s8 %v2418
      %v2420 = vlaneseq
      %v2421 = vshrl.u32 %v2420, 7
      %v2422 = vsub.s32 %v2419, %v2421
      %v2423 = vrot.slane %v2409, %v2422
      %v2424 = vcombine.high %v2416, %v2416
      %v2425 = vcombine.high %v2423, %v2423
      %v2426 = vcombine.high %v2122, %v2122
      %v2428 = vunpack.c.l.s4 1983009808
      %v2429 = vunpack.c.0.s8 %v2428
      %v2430 = vlaneseq
      %v2431 = vshrl.u32 %v2430, 7
      %v2432 = vsub.s32 %v2429, %v2431
      %v2433 = vrot.slane %v2122, %v2432
      %v2435 = vunpack.c.l.s4 1983009808
      %v2436 = vunpack.c.0.s8 %v2435
      %v2437 = vlaneseq
      %v2438 = vshrl.u32 %v2437, 7
      %v2439 = vsub.s32 %v2436, %v2438
      %v2440 = vrot.slane %v2426, %v2439
      %v2441 = vcombine.high %v2433, %v2433
      %v2442 = vcombine.high %v2440, %v2440
      %v2443 = vcombine.high %v2127, %v2127
      %v2445 = vunpack.c.l.s4 1983009808
      %v2446 = vunpack.c.0.s8 %v2445
      %v2447 = vlaneseq
      %v2448 = vshrl.u32 %v2447, 7
      %v2449 = vsub.s32 %v2446, %v2448
      %v2450 = vrot.slane %v2127, %v2449
      %v2452 = vunpack.c.l.s4 1983009808
      %v2453 = vunpack.c.0.s8 %v2452
      %v2454 = vlaneseq
      %v2455 = vshrl.u32 %v2454, 7
      %v2456 = vsub.s32 %v2453, %v2455
      %v2457 = vrot.slane %v2443, %v2456
      %v2458 = vcombine.high %v2450, %v2450
      %v2459 = vcombine.high %v2457, %v2457
      %v2460 = vcombine.high %v2132, %v2132
      %v2462 = vunpack.c.l.s4 1983009808
      %v2463 = vunpack.c.0.s8 %v2462
      %v2464 = vlaneseq
      %v2465 = vshrl.u32 %v2464, 7
      %v2466 = vsub.s32 %v2463, %v2465
      %v2467 = vrot.slane %v2132, %v2466
      %v2469 = vunpack.c.l.s4 1983009808
      %v2470 = vunpack.c.0.s8 %v2469
      %v2471 = vlaneseq
      %v2472 = vshrl.u32 %v2471, 7
      %v2473 = vsub.s32 %v2470, %v2472
      %v2474 = vrot.slane %v2460, %v2473
      %v2475 = vcombine.high %v2467, %v2467
      %v2476 = vcombine.high %v2474, %v2474
      %v2477 = vcombine.high %v2137, %v2137
      %v2479 = vunpack.c.l.s4 1983009808
      %v2480 = vunpack.c.0.s8 %v2479
      %v2481 = vlaneseq
      %v2482 = vshrl.u32 %v2481, 7
      %v2483 = vsub.s32 %v2480, %v2482
      %v2484 = vrot.slane %v2137, %v2483
      %v2486 = vunpack.c.l.s4 1983009808
      %v2487 = vunpack.c.0.s8 %v2486
      %v2488 = vlaneseq
      %v2489 = vshrl.u32 %v2488, 7
      %v2490 = vsub.s32 %v2487, %v2489
      %v2491 = vrot.slane %v2477, %v2490
      %v2492 = vcombine.high %v2484, %v2484
      %v2493 = vcombine.high %v2491, %v2491
      %v2494 = vcombine.high %v2142, %v2142
      %v2496 = vunpack.c.l.s4 1983009808
      %v2497 = vunpack.c.0.s8 %v2496
      %v2498 = vlaneseq
      %v2499 = vshrl.u32 %v2498, 7
      %v2500 = vsub.s32 %v2497, %v2499
      %v2501 = vrot.slane %v2142, %v2500
      %v2503 = vunpack.c.l.s4 1983009808
      %v2504 = vunpack.c.0.s8 %v2503
      %v2505 = vlaneseq
      %v2506 = vshrl.u32 %v2505, 7
      %v2507 = vsub.s32 %v2504, %v2506
      %v2508 = vrot.slane %v2494, %v2507
      %v2509 = vcombine.high %v2501, %v2501
      %v2510 = vcombine.high %v2508, %v2508
      %v2511 = vcombine.high %v2147, %v2147
      %v2513 = vunpack.c.l.s4 1983009808
      %v2514 = vunpack.c.0.s8 %v2513
      %v2515 = vlaneseq
      %v2516 = vshrl.u32 %v2515, 7
      %v2517 = vsub.s32 %v2514, %v2516
      %v2518 = vrot.slane %v2147, %v2517
      %v2520 = vunpack.c.l.s4 1983009808
      %v2521 = vunpack.c.0.s8 %v2520
      %v2522 = vlaneseq
      %v2523 = vshrl.u32 %v2522, 7
      %v2524 = vsub.s32 %v2521, %v2523
      %v2525 = vrot.slane %v2511, %v2524
      %v2526 = vcombine.high %v2518, %v2518
      %v2527 = vcombine.high %v2525, %v2525
      %v2528 = vcombine.high %v2152, %v2152
      %v2530 = vunpack.c.l.s4 1983009808
      %v2531 = vunpack.c.0.s8 %v2530
      %v2532 = vlaneseq
      %v2533 = vshrl.u32 %v2532, 7
      %v2534 = vsub.s32 %v2531, %v2533
      %v2535 = vrot.slane %v2152, %v2534
      %v2537 = vunpack.c.l.s4 1983009808
      %v2538 = vunpack.c.0.s8 %v2537
      %v2539 = vlaneseq
      %v2540 = vshrl.u32 %v2539, 7
      %v2541 = vsub.s32 %v2538, %v2540
      %v2542 = vrot.slane %v2528, %v2541
      %v2543 = vcombine.high %v2535, %v2535
      %v2544 = vcombine.high %v2542, %v2542
      %v2545 = vcombine.high %v2157, %v2157
      %v2547 = vunpack.c.l.s4 1983009808
      %v2548 = vunpack.c.0.s8 %v2547
      %v2549 = vlaneseq
      %v2550 = vshrl.u32 %v2549, 7
      %v2551 = vsub.s32 %v2548, %v2550
      %v2552 = vrot.slane %v2157, %v2551
      %v2554 = vunpack.c.l.s4 1983009808
      %v2555 = vunpack.c.0.s8 %v2554
      %v2556 = vlaneseq
      %v2557 = vshrl.u32 %v2556, 7
      %v2558 = vsub.s32 %v2555, %v2557
      %v2559 = vrot.slane %v2545, %v2558
      %v2560 = vcombine.high %v2552, %v2552
      %v2561 = vcombine.high %v2559, %v2559
      %v2562 = vcombine.high %v2162, %v2162
      %v2564 = vunpack.c.l.s4 1983009808
      %v2565 = vunpack.c.0.s8 %v2564
      %v2566 = vlaneseq
      %v2567 = vshrl.u32 %v2566, 7
      %v2568 = vsub.s32 %v2565, %v2567
      %v2569 = vrot.slane %v2162, %v2568
      %v2571 = vunpack.c.l.s4 1983009808
      %v2572 = vunpack.c.0.s8 %v2571
      %v2573 = vlaneseq
      %v2574 = vshrl.u32 %v2573, 7
      %v2575 = vsub.s32 %v2572, %v2574
      %v2576 = vrot.slane %v2562, %v2575
      %v2577 = vcombine.high %v2569, %v2569
      %v2578 = vcombine.high %v2576, %v2576
      %v2579 = vcombine.high %v2167, %v2167
      %v2581 = vunpack.c.l.s4 1983009808
      %v2582 = vunpack.c.0.s8 %v2581
      %v2583 = vlaneseq
      %v2584 = vshrl.u32 %v2583, 7
      %v2585 = vsub.s32 %v2582, %v2584
      %v2586 = vrot.slane %v2167, %v2585
      %v2588 = vunpack.c.l.s4 1983009808
      %v2589 = vunpack.c.0.s8 %v2588
      %v2590 = vlaneseq
      %v2591 = vshrl.u32 %v2590, 7
      %v2592 = vsub.s32 %v2589, %v2591
      %v2593 = vrot.slane %v2579, %v2592
      %v2594 = vcombine.high %v2586, %v2586
      %v2595 = vcombine.high %v2593, %v2593
      %v2596 = vcombine.high %v2172, %v2172
      %v2598 = vunpack.c.l.s4 1983009808
      %v2599 = vunpack.c.0.s8 %v2598
      %v2600 = vlaneseq
      %v2601 = vshrl.u32 %v2600, 7
      %v2602 = vsub.s32 %v2599, %v2601
      %v2603 = vrot.slane %v2172, %v2602
      %v2605 = vunpack.c.l.s4 1983009808
      %v2606 = vunpack.c.0.s8 %v2605
      %v2607 = vlaneseq
      %v2608 = vshrl.u32 %v2607, 7
      %v2609 = vsub.s32 %v2606, %v2608
      %v2610 = vrot.slane %v2596, %v2609
      %v2611 = vcombine.high %v2603, %v2603
      %v2612 = vcombine.high %v2610, %v2610
      %v2614 = vunpack.c.l.s4 1983009808
      %v2615 = vunpack.c.0.s8 %v2614
      %v2616 = vlaneseq
      %v2617 = vshrl.u32 %v2616, 7
      %v2618 = vsub.s32 %v2615, %v2617
      %v2619 = vrot.slane %v2177, %v2618
      %v2620 = vcombine.high %v2619, %v2619
      %v2621 = vcombine.low %v2212, %v2220
      %v2622 = vcombine.low %v2219, %v2221
      %v2624 = vunpack.c.l.s4 1983009808
      %v2625 = vunpack.c.0.s8 %v2624
      %v2626 = vlaneseq
      %v2627 = vshrl.u32 %v2626, 7
      %v2628 = vsub.s32 %v2625, %v2627
      %v2629 = vrot.slane %v2621, %v2628
      %v2631 = vunpack.c.l.s4 1983009808
      %v2632 = vunpack.c.0.s8 %v2631
      %v2633 = vlaneseq
      %v2634 = vshrl.u32 %v2633, 7
      %v2635 = vsub.s32 %v2632, %v2634
      %v2636 = vrot.slane %v2622, %v2635
      %v2637 = vcombine.low %v2629, %v2636
      %v2638 = vcombine.low %v2229, %v2237
      %v2640 = vunpack.c.l.s4 1983009808
      %v2641 = vunpack.c.0.s8 %v2640
      %v2642 = vlaneseq
      %v2643 = vshrl.u32 %v2642, 7
      %v2644 = vsub.s32 %v2641, %v2643
      %v2645 = vrot.slane %v2638, %v2644
      %v2647 = vunpack.c.l.s4 1983009808
      %v2648 = vunpack.c.0.s8 %v2647
      %v2649 = vlaneseq
      %v2650 = vshrl.u32 %v2649, 7
      %v2651 = vsub.s32 %v2648, %v2650
      %v2652 = vrot.slane %v2236, %v2651
      %v2653 = vcombine.low %v2645, %v2652
      %v2654 = vcombine.low %v2238, %v2246
      %v2655 = vcombine.low %v2254, %v2253
      %v2657 = vunpack.c.l.s4 1983009808
      %v2658 = vunpack.c.0.s8 %v2657
      %v2659 = vlaneseq
      %v2660 = vshrl.u32 %v2659, 7
      %v2661 = vsub.s32 %v2658, %v2660
      %v2662 = vrot.slane %v2654, %v2661
      %v2664 = vunpack.c.l.s4 1983009808
      %v2665 = vunpack.c.0.s8 %v2664
      %v2666 = vlaneseq
      %v2667 = vshrl.u32 %v2666, 7
      %v2668 = vsub.s32 %v2665, %v2667
      %v2669 = vrot.slane %v2655, %v2668
      %v2670 = vcombine.low %v2662, %v2669
      %v2671 = vcombine.low %v2255, %v2263
      %v2673 = vunpack.c.l.s4 1983009808
      %v2674 = vunpack.c.0.s8 %v2673
      %v2675 = vlaneseq
      %v2676 = vshrl.u32 %v2675, 7
      %v2677 = vsub.s32 %v2674, %v2676
      %v2678 = vrot.slane %v2671, %v2677
      %v2680 = vunpack.c.l.s4 1983009808
      %v2681 = vunpack.c.0.s8 %v2680
      %v2682 = vlaneseq
      %v2683 = vshrl.u32 %v2682, 7
      %v2684 = vsub.s32 %v2681, %v2683
      %v2685 = vrot.slane %v2271, %v2684
      %v2686 = vcombine.low %v2678, %v2685
      %v2687 = vcombine.low %v2270, %v2272
      %v2688 = vcombine.low %v2280, %v2288
      %v2690 = vunpack.c.l.s4 1983009808
      %v2691 = vunpack.c.0.s8 %v2690
      %v2692 = vlaneseq
      %v2693 = vshrl.u32 %v2692, 7
      %v2694 = vsub.s32 %v2691, %v2693
      %v2695 = vrot.slane %v2687, %v2694
      %v2697 = vunpack.c.l.s4 1983009808
      %v2698 = vunpack.c.0.s8 %v2697
      %v2699 = vlaneseq
      %v2700 = vshrl.u32 %v2699, 7
      %v2701 = vsub.s32 %v2698, %v2700
      %v2702 = vrot.slane %v2688, %v2701
      %v2703 = vcombine.low %v2695, %v2702
      %v2704 = vcombine.low %v2287, %v2289
      %v2706 = vunpack.c.l.s4 1983009808
      %v2707 = vunpack.c.0.s8 %v2706
      %v2708 = vlaneseq
      %v2709 = vshrl.u32 %v2708, 7
      %v2710 = vsub.s32 %v2707, %v2709
      %v2711 = vrot.slane %v2704, %v2710
      %v2713 = vunpack.c.l.s4 1983009808
      %v2714 = vunpack.c.0.s8 %v2713
      %v2715 = vlaneseq
      %v2716 = vshrl.u32 %v2715, 7
      %v2717 = vsub.s32 %v2714, %v2716
      %v2718 = vrot.slane %v2297, %v2717
      %v2719 = vcombine.low %v2711, %v2718
      %v2720 = vcombine.low %v2305, %v2304
      %v2721 = vcombine.low %v2306, %v2314
      %v2723 = vunpack.c.l.s4 1983009808
      %v2724 = vunpack.c.0.s8 %v2723
      %v2725 = vlaneseq
      %v2726 = vshrl.u32 %v2725, 7
      %v2727 = vsub.s32 %v2724, %v2726
      %v2728 = vrot.slane %v2720, %v2727
      %v2730 = vunpack.c.l.s4 1983009808
      %v2731 = vunpack.c.0.s8 %v2730
      %v2732 = vlaneseq
      %v2733 = vshrl.u32 %v2732, 7
      %v2734 = vsub.s32 %v2731, %v2733
      %v2735 = vrot.slane %v2721, %v2734
      %v2736 = vcombine.low %v2728, %v2735
      %v2737 = vcombine.low %v2322, %v2321
      %v2739 = vunpack.c.l.s4 1983009808
      %v2740 = vunpack.c.0.s8 %v2739
      %v2741 = vlaneseq
      %v2742 = vshrl.u32 %v2741, 7
      %v2743 = vsub.s32 %v2740, %v2742
      %v2744 = vrot.slane %v2737, %v2743
      %v2746 = vunpack.c.l.s4 1983009808
      %v2747 = vunpack.c.0.s8 %v2746
      %v2748 = vlaneseq
      %v2749 = vshrl.u32 %v2748, 7
      %v2750 = vsub.s32 %v2747, %v2749
      %v2751 = vrot.slane %v2323, %v2750
      %v2752 = vcombine.low %v2744, %v2751
      %v2753 = vcombine.low %v2331, %v2339
      %v2754 = vcombine.low %v2338, %v2340
      %v2756 = vunpack.c.l.s4 1983009808
      %v2757 = vunpack.c.0.s8 %v2756
      %v2758 = vlaneseq
      %v2759 = vshrl.u32 %v2758, 7
      %v2760 = vsub.s32 %v2757, %v2759
      %v2761 = vrot.slane %v2753, %v2760
      %v2763 = vunpack.c.l.s4 1983009808
      %v2764 = vunpack.c.0.s8 %v2763
      %v2765 = vlaneseq
      %v2766 = vshrl.u32 %v2765, 7
      %v2767 = vsub.s32 %v2764, %v2766
      %v2768 = vrot.slane %v2754, %v2767
      %v2769 = vcombine.low %v2761, %v2768
      %v2770 = vcombine.low %v2348, %v2356
      %v2772 = vunpack.c.l.s4 1983009808
      %v2773 = vunpack.c.0.s8 %v2772
      %v2774 = vlaneseq
      %v2775 = vshrl.u32 %v2774, 7
      %v2776 = vsub.s32 %v2773, %v2775
      %v2777 = vrot.slane %v2770, %v2776
      %v2779 = vunpack.c.l.s4 1983009808
      %v2780 = vunpack.c.0.s8 %v2779
      %v2781 = vlaneseq
      %v2782 = vshrl.u32 %v2781, 7
      %v2783 = vsub.s32 %v2780, %v2782
      %v2784 = vrot.slane %v2355, %v2783
      %v2785 = vcombine.low %v2777, %v2784
      %v2786 = vcombine.low %v2357, %v2365
      %v2787 = vcombine.low %v2373, %v2372
      %v2789 = vunpack.c.l.s4 1983009808
      %v2790 = vunpack.c.0.s8 %v2789
      %v2791 = vlaneseq
      %v2792 = vshrl.u32 %v2791, 7
      %v2793 = vsub.s32 %v2790, %v2792
      %v2794 = vrot.slane %v2786, %v2793
      %v2796 = vunpack.c.l.s4 1983009808
      %v2797 = vunpack.c.0.s8 %v2796
      %v2798 = vlaneseq
      %v2799 = vshrl.u32 %v2798, 7
      %v2800 = vsub.s32 %v2797, %v2799
      %v2801 = vrot.slane %v2787, %v2800
      %v2802 = vcombine.low %v2794, %v2801
      %v2803 = vcombine.low %v2374, %v2382
      %v2805 = vunpack.c.l.s4 1983009808
      %v2806 = vunpack.c.0.s8 %v2805
      %v2807 = vlaneseq
      %v2808 = vshrl.u32 %v2807, 7
      %v2809 = vsub.s32 %v2806, %v2808
      %v2810 = vrot.slane %v2803, %v2809
      %v2812 = vunpack.c.l.s4 1983009808
      %v2813 = vunpack.c.0.s8 %v2812
      %v2814 = vlaneseq
      %v2815 = vshrl.u32 %v2814, 7
      %v2816 = vsub.s32 %v2813, %v2815
      %v2817 = vrot.slane %v2390, %v2816
      %v2818 = vcombine.low %v2810, %v2817
      %v2819 = vcombine.low %v2389, %v2391
      %v2820 = vcombine.low %v2399, %v2407
      %v2822 = vunpack.c.l.s4 1983009808
      %v2823 = vunpack.c.0.s8 %v2822
      %v2824 = vlaneseq
      %v2825 = vshrl.u32 %v2824, 7
      %v2826 = vsub.s32 %v2823, %v2825
      %v2827 = vrot.slane %v2819, %v2826
      %v2829 = vunpack.c.l.s4 1983009808
      %v2830 = vunpack.c.0.s8 %v2829
      %v2831 = vlaneseq
      %v2832 = vshrl.u32 %v2831, 7
      %v2833 = vsub.s32 %v2830, %v2832
      %v2834 = vrot.slane %v2820, %v2833
      %v2835 = vcombine.low %v2827, %v2834
      %v2836 = vcombine.low %v2406, %v2408
      %v2838 = vunpack.c.l.s4 1983009808
      %v2839 = vunpack.c.0.s8 %v2838
      %v2840 = vlaneseq
      %v2841 = vshrl.u32 %v2840, 7
      %v2842 = vsub.s32 %v2839, %v2841
      %v2843 = vrot.slane %v2836, %v2842
      %v2845 = vunpack.c.l.s4 1983009808
      %v2846 = vunpack.c.0.s8 %v2845
      %v2847 = vlaneseq
      %v2848 = vshrl.u32 %v2847, 7
      %v2849 = vsub.s32 %v2846, %v2848
      %v2850 = vrot.slane %v2416, %v2849
      %v2851 = vcombine.low %v2843, %v2850
      %v2852 = vcombine.low %v2424, %v2423
      %v2853 = vcombine.low %v2425, %v2433
      %v2855 = vunpack.c.l.s4 1983009808
      %v2856 = vunpack.c.0.s8 %v2855
      %v2857 = vlaneseq
      %v2858 = vshrl.u32 %v2857, 7
      %v2859 = vsub.s32 %v2856, %v2858
      %v2860 = vrot.slane %v2852, %v2859
      %v2862 = vunpack.c.l.s4 1983009808
      %v2863 = vunpack.c.0.s8 %v2862
      %v2864 = vlaneseq
      %v2865 = vshrl.u32 %v2864, 7
      %v2866 = vsub.s32 %v2863, %v2865
      %v2867 = vrot.slane %v2853, %v2866
      %v2868 = vcombine.low %v2860, %v2867
      %v2869 = vcombine.low %v2441, %v2440
      %v2871 = vunpack.c.l.s4 1983009808
      %v2872 = vunpack.c.0.s8 %v2871
      %v2873 = vlaneseq
      %v2874 = vshrl.u32 %v2873, 7
      %v2875 = vsub.s32 %v2872, %v2874
      %v2876 = vrot.slane %v2869, %v2875
      %v2878 = vunpack.c.l.s4 1983009808
      %v2879 = vunpack.c.0.s8 %v2878
      %v2880 = vlaneseq
      %v2881 = vshrl.u32 %v2880, 7
      %v2882 = vsub.s32 %v2879, %v2881
      %v2883 = vrot.slane %v2442, %v2882
      %v2884 = vcombine.low %v2876, %v2883
      %v2885 = vcombine.low %v2450, %v2458
      %v2886 = vcombine.low %v2457, %v2459
      %v2888 = vunpack.c.l.s4 1983009808
      %v2889 = vunpack.c.0.s8 %v2888
      %v2890 = vlaneseq
      %v2891 = vshrl.u32 %v2890, 7
      %v2892 = vsub.s32 %v2889, %v2891
      %v2893 = vrot.slane %v2885, %v2892
      %v2895 = vunpack.c.l.s4 1983009808
      %v2896 = vunpack.c.0.s8 %v2895
      %v2897 = vlaneseq
      %v2898 = vshrl.u32 %v2897, 7
      %v2899 = vsub.s32 %v2896, %v2898
      %v2900 = vrot.slane %v2886, %v2899
      %v2901 = vcombine.low %v2893, %v2900
      %v2902 = vcombine.low %v2467, %v2475
      %v2904 = vunpack.c.l.s4 1983009808
      %v2905 = vunpack.c.0.s8 %v2904
      %v2906 = vlaneseq
      %v2907 = vshrl.u32 %v2906, 7
      %v2908 = vsub.s32 %v2905, %v2907
      %v2909 = vrot.slane %v2902, %v2908
      %v2911 = vunpack.c.l.s4 1983009808
      %v2912 = vunpack.c.0.s8 %v2911
      %v2913 = vlaneseq
      %v2914 = vshrl.u32 %v2913, 7
      %v2915 = vsub.s32 %v2912, %v2914
      %v2916 = vrot.slane %v2474, %v2915
      %v2917 = vcombine.low %v2909, %v2916
      %v2918 = vcombine.low %v2476, %v2484
      %v2919 = vcombine.low %v2492, %v2491
      %v2921 = vunpack.c.l.s4 1983009808
      %v2922 = vunpack.c.0.s8 %v2921
      %v2923 = vlaneseq
      %v2924 = vshrl.u32 %v2923, 7
      %v2925 = vsub.s32 %v2922, %v2924
      %v2926 = vrot.slane %v2918, %v2925
      %v2928 = vunpack.c.l.s4 1983009808
      %v2929 = vunpack.c.0.s8 %v2928
      %v2930 = vlaneseq
      %v2931 = vshrl.u32 %v2930, 7
      %v2932 = vsub.s32 %v2929, %v2931
      %v2933 = vrot.slane %v2919, %v2932
      %v2934 = vcombine.low %v2926, %v2933
      %v2935 = vcombine.low %v2493, %v2501
      %v2937 = vunpack.c.l.s4 1983009808
      %v2938 = vunpack.c.0.s8 %v2937
      %v2939 = vlaneseq
      %v2940 = vshrl.u32 %v2939, 7
      %v2941 = vsub.s32 %v2938, %v2940
      %v2942 = vrot.slane %v2935, %v2941
      %v2944 = vunpack.c.l.s4 1983009808
      %v2945 = vunpack.c.0.s8 %v2944
      %v2946 = vlaneseq
      %v2947 = vshrl.u32 %v2946, 7
      %v2948 = vsub.s32 %v2945, %v2947
      %v2949 = vrot.slane %v2509, %v2948
      %v2950 = vcombine.low %v2942, %v2949
      %v2951 = vcombine.low %v2508, %v2510
      %v2952 = vcombine.low %v2518, %v2526
      %v2954 = vunpack.c.l.s4 1983009808
      %v2955 = vunpack.c.0.s8 %v2954
      %v2956 = vlaneseq
      %v2957 = vshrl.u32 %v2956, 7
      %v2958 = vsub.s32 %v2955, %v2957
      %v2959 = vrot.slane %v2951, %v2958
      %v2961 = vunpack.c.l.s4 1983009808
      %v2962 = vunpack.c.0.s8 %v2961
      %v2963 = vlaneseq
      %v2964 = vshrl.u32 %v2963, 7
      %v2965 = vsub.s32 %v2962, %v2964
      %v2966 = vrot.slane %v2952, %v2965
      %v2967 = vcombine.low %v2959, %v2966
      %v2968 = vcombine.low %v2525, %v2527
      %v2970 = vunpack.c.l.s4 1983009808
      %v2971 = vunpack.c.0.s8 %v2970
      %v2972 = vlaneseq
      %v2973 = vshrl.u32 %v2972, 7
      %v2974 = vsub.s32 %v2971, %v2973
      %v2975 = vrot.slane %v2968, %v2974
      %v2977 = vunpack.c.l.s4 1983009808
      %v2978 = vunpack.c.0.s8 %v2977
      %v2979 = vlaneseq
      %v2980 = vshrl.u32 %v2979, 7
      %v2981 = vsub.s32 %v2978, %v2980
      %v2982 = vrot.slane %v2535, %v2981
      %v2983 = vcombine.low %v2975, %v2982
      %v2984 = vcombine.low %v2543, %v2542
      %v2985 = vcombine.low %v2544, %v2552
      %v2987 = vunpack.c.l.s4 1983009808
      %v2988 = vunpack.c.0.s8 %v2987
      %v2989 = vlaneseq
      %v2990 = vshrl.u32 %v2989, 7
      %v2991 = vsub.s32 %v2988, %v2990
      %v2992 = vrot.slane %v2984, %v2991
      %v2994 = vunpack.c.l.s4 1983009808
      %v2995 = vunpack.c.0.s8 %v2994
      %v2996 = vlaneseq
      %v2997 = vshrl.u32 %v2996, 7
      %v2998 = vsub.s32 %v2995, %v2997
      %v2999 = vrot.slane %v2985, %v2998
      %v3000 = vcombine.low %v2992, %v2999
      %v3001 = vcombine.low %v2560, %v2559
      %v3003 = vunpack.c.l.s4 1983009808
      %v3004 = vunpack.c.0.s8 %v3003
      %v3005 = vlaneseq
      %v3006 = vshrl.u32 %v3005, 7
      %v3007 = vsub.s32 %v3004, %v3006
      %v3008 = vrot.slane %v3001, %v3007
      %v3010 = vunpack.c.l.s4 1983009808
      %v3011 = vunpack.c.0.s8 %v3010
      %v3012 = vlaneseq
      %v3013 = vshrl.u32 %v3012, 7
      %v3014 = vsub.s32 %v3011, %v3013
      %v3015 = vrot.slane %v2561, %v3014
      %v3016 = vcombine.low %v3008, %v3015
      %v3017 = vcombine.low %v2569, %v2577
      %v3018 = vcombine.low %v2576, %v2578
      %v3020 = vunpack.c.l.s4 1983009808
      %v3021 = vunpack.c.0.s8 %v3020
      %v3022 = vlaneseq
      %v3023 = vshrl.u32 %v3022, 7
      %v3024 = vsub.s32 %v3021, %v3023
      %v3025 = vrot.slane %v3017, %v3024
      %v3027 = vunpack.c.l.s4 1983009808
      %v3028 = vunpack.c.0.s8 %v3027
      %v3029 = vlaneseq
      %v3030 = vshrl.u32 %v3029, 7
      %v3031 = vsub.s32 %v3028, %v3030
      %v3032 = vrot.slane %v3018, %v3031
      %v3033 = vcombine.low %v3025, %v3032
      %v3034 = vcombine.low %v2586, %v2594
      %v3036 = vunpack.c.l.s4 1983009808
      %v3037 = vunpack.c.0.s8 %v3036
      %v3038 = vlaneseq
      %v3039 = vshrl.u32 %v3038, 7
      %v3040 = vsub.s32 %v3037, %v3039
      %v3041 = vrot.slane %v3034, %v3040
      %v3043 = vunpack.c.l.s4 1983009808
      %v3044 = vunpack.c.0.s8 %v3043
      %v3045 = vlaneseq
      %v3046 = vshrl.u32 %v3045, 7
      %v3047 = vsub.s32 %v3044, %v3046
      %v3048 = vrot.slane %v2593, %v3047
      %v3049 = vcombine.low %v3041, %v3048
      %v3050 = vcombine.low %v2595, %v2603
      %v3051 = vcombine.low %v2611, %v2610
      %v3053 = vunpack.c.l.s4 1983009808
      %v3054 = vunpack.c.0.s8 %v3053
      %v3055 = vlaneseq
      %v3056 = vshrl.u32 %v3055, 7
      %v3057 = vsub.s32 %v3054, %v3056
      %v3058 = vrot.slane %v3050, %v3057
      %v3060 = vunpack.c.l.s4 1983009808
      %v3061 = vunpack.c.0.s8 %v3060
      %v3062 = vlaneseq
      %v3063 = vshrl.u32 %v3062, 7
      %v3064 = vsub.s32 %v3061, %v3063
      %v3065 = vrot.slane %v3051, %v3064
      %v3066 = vcombine.low %v3058, %v3065
      %v3067 = vcombine.low %v2612, %v2619
      %v3069 = vunpack.c.l.s4 1983009808
      %v3070 = vunpack.c.0.s8 %v3069
      %v3071 = vlaneseq
      %v3072 = vshrl.u32 %v3071, 7
      %v3073 = vsub.s32 %v3070, %v3072
      %v3074 = vrot.slane %v3067, %v3073
      %v3076 = vunpack.c.l.s4 1983009808
      %v3077 = vunpack.c.0.s8 %v3076
      %v3078 = vlaneseq
      %v3079 = vshrl.u32 %v3078, 7
      %v3080 = vsub.s32 %v3077, %v3079
      %v3081 = vrot.slane %v2620, %v3080
      %v3082 = vcombine.low %v3074, %v3081
      %vm3111 = vcmask 64512
      %3112 = vst.msk [vmem:[%s194] sm:$0xff] %vm3111, %v2637
      %vm3113 = vcmask 62464
      %3114 = vst.msk [vmem:[%s194 + $0x8] sm:$0x3f] %vm3113, %v2653
      %3115 = vst.msk [vmem:[%s194 + $0x10] sm:$0xff] %vm3111, %v2670
      %3116 = vst.msk [vmem:[%s194 + $0x18] sm:$0x3f] %vm3113, %v2686
      %3117 = vst.msk [vmem:[%s194 + $0x20] sm:$0xff] %vm3111, %v2703
      %3118 = vst.msk [vmem:[%s194 + $0x28] sm:$0x3f] %vm3113, %v2719
      %3119 = vst.msk [vmem:[%s194 + $0x30] sm:$0xff] %vm3111, %v2736
      %3120 = vst.msk [vmem:[%s194 + $0x38] sm:$0x3f] %vm3113, %v2752
      %3121 = vst.msk [vmem:[%s194 + $0x40] sm:$0xff] %vm3111, %v2769
      %3122 = vst.msk [vmem:[%s194 + $0x48] sm:$0x3f] %vm3113, %v2785
      %3123 = vst.msk [vmem:[%s194 + $0x50] sm:$0xff] %vm3111, %v2802
      %3124 = vst.msk [vmem:[%s194 + $0x58] sm:$0x3f] %vm3113, %v2818
      %3125 = vst.msk [vmem:[%s194 + $0x60] sm:$0xff] %vm3111, %v2835
      %3126 = vst.msk [vmem:[%s194 + $0x68] sm:$0x3f] %vm3113, %v2851
      %3127 = vst.msk [vmem:[%s194 + $0x70] sm:$0xff] %vm3111, %v2868
      %3128 = vst.msk [vmem:[%s194 + $0x78] sm:$0x3f] %vm3113, %v2884
      %3129 = vst.msk [vmem:[%s194 + $0x80] sm:$0xff] %vm3111, %v2901
      %3130 = vst.msk [vmem:[%s194 + $0x88] sm:$0x3f] %vm3113, %v2917
      %3131 = vst.msk [vmem:[%s194 + $0x90] sm:$0xff] %vm3111, %v2934
      %3132 = vst.msk [vmem:[%s194 + $0x98] sm:$0x3f] %vm3113, %v2950
      %3133 = vst.msk [vmem:[%s194 + $0xa0] sm:$0xff] %vm3111, %v2967
      %3134 = vst.msk [vmem:[%s194 + $0xa8] sm:$0x3f] %vm3113, %v2983
      %3135 = vst.msk [vmem:[%s194 + $0xb0] sm:$0xff] %vm3111, %v3000
      %3136 = vst.msk [vmem:[%s194 + $0xb8] sm:$0x3f] %vm3113, %v3016
      %3137 = vst.msk [vmem:[%s194 + $0xc0] sm:$0xff] %vm3111, %v3033
      %3138 = vst.msk [vmem:[%s194 + $0xc8] sm:$0x3f] %vm3113, %v3049
      %3139 = vst.msk [vmem:[%s194 + $0xd0] sm:$0xff] %vm3111, %v3066
      %3140 = vst.msk [vmem:[%s194 + $0xd8] sm:$0x3f] %vm3113, %v3082
      %s3141 = smul.u32 14, %s19
      %p3142 = scmp.lt.s32.totalorder %s18, 1
      %s3143 = scalar_select %p3142, %s18, 1
      %p3144 = scmp.lt.s32.totalorder %s3141, 13
      %s3145 = scalar_select %p3144, %s3141, 13
      %s3146 = smul.addr %s3145, 2
      %s3147 = smul.addr %s3143, 28
      %s3148 = sadd.s32 %s3146, %s3147
      %s3149 = smul.addr %s3148, 8
      %s3150 = scalar_lea.vmem %s3, %s3149
      // Predicated region
      $region33: #{tpu_custom_call.1} parent=31 // pred_check
        %p3151 = pneg %p114
      $region34: #{tpu_custom_call.1} parent=31 // pred_check_branch
        %3153 = sbr.rel (%p3151) target = $region36
      $region35: #{tpu_custom_call.1} parent=31 // pred_region
        %s3154 = smul.u32 14, %s19
      $region36: #{tpu_custom_call.1} parent=31 // pred_fallthru
        _
    $region32: #{tpu_custom_call.1} parent=5 // pred_fallthru
      _
    %p3155 = scmp.le.s32.totalorder 2, %s9
    // Predicated region
    $region37: #{tpu_custom_call.1} parent=5 // pred_check
      %p3156 = pneg %p3155
    $region38: #{tpu_custom_call.1} parent=5 // pred_check_branch
      %3158 = sbr.rel (%p3156) target = $region40
    $region39: #{tpu_custom_call.1} parent=5 // pred_region
      %s3159 = ssub.s32 %s9, 2
      // Predicated region
      $region41: #{tpu_custom_call.1} parent=39 // pred_check
        %p3160 = pneg %p120
      $region42: #{tpu_custom_call.1} parent=39 // pred_check_branch
        %3162 = sbr.rel (%p3160) target = $region44
      $region43: #{tpu_custom_call.1} parent=39 // pred_region
        %s3163 = smul.u32 14, %s21
        %p3164 = scmp.lt.s32.totalorder %s20, 1
        %s3165 = scalar_select %p3164, %s20, 1
        %p3166 = scmp.lt.s32.totalorder %s3163, 13
        %s3167 = scalar_select %p3166, %s3163, 13
        %s3168 = smul.addr %s3167, 2
        %s3169 = smul.addr %s3165, 28
        %s3170 = sadd.s32 %s3168, %s3169
        %s3171 = smul.addr %s3170, 8
        %s3172 = scalar_lea.vmem %s3, %s3171
      $region44: #{tpu_custom_call.1} parent=39 // pred_fallthru
        _
    $region40: #{tpu_custom_call.1} parent=5 // pred_fallthru
      _
  $region6: #{tpu_custom_call.1} parent=0 // loop_footer
    %s13 = sadd.s32 1, %s9
  $region7: #{tpu_custom_call.1} parent=0 // loop_footer_branch
    %8 = sbr.rel target = $region3
  $region8: #{tpu_custom_call.1} parent=0 // loop_exit
    _

</llo_original>
